<compile_context>
chip_gen: v5e
topology: v5e:2x2
jax: 0.10.0
libtpu: 0.0.40
codegen_flags: <defaults>
</compile_context>

<pallas_src>
import functools

import jax
import jax.numpy as jnp
from jax.experimental import pallas as pl
from jax.experimental.pallas import tpu as pltpu

_LANES = 128      # vreg lane width
_SUBLANES = 8     # vreg sublane count


def _round_up(x, m):
    return ((x + m - 1) // m) * m


def _pad_gate_cols(w, h, hp):
    """Zero-pad each of the 4 gate blocks along the last axis from h to hp."""
    if hp == h:
        return w
    parts = jnp.split(w, 4, axis=-1)
    pad_width = [(0, 0)] * (w.ndim - 1) + [(0, hp - h)]
    return jnp.concatenate([jnp.pad(p, pad_width) for p in parts], axis=-1)


def _choose_time_chunk(seq_len, bt, hp, max_chunk=32,
                       vmem_budget_bytes=24 * 1024 * 1024):
    """Largest divisor of seq_len (<= max_chunk) whose streaming blocks fit VMEM.

    Budget = double-buffered x_proj input + y output blocks (f32) + resident
    (double-buffered) bf16 W_hh.  24 MiB keeps us safely under v7x's 64 MiB
    physical / 32 MiB default scoped VMEM, and v5e/v6e are roomier.
    """
    weight_bytes = 2 * (hp * 4 * hp) * 2           # 2 buffers x bf16 W_hh
    best = 1
    for t in range(1, min(seq_len, max_chunk) + 1):
        if seq_len % t:
            continue
        stream = 2 * (t * bt * 4 * hp + t * bt * hp) * 4
        if weight_bytes + stream <= vmem_budget_bytes:
            best = t
    return best


# ---------------------------------------------------------------------------
# Pallas kernel: the sequential LSTM recurrence (hot path)
# ---------------------------------------------------------------------------
def _lstm_recurrence_kernel(xp_ref, whh_ref, y_ref, c_out_ref, h_scr, c_scr):
    """One time-chunk of the LSTM recurrence.

    Grid = (batch_blocks, time_chunks).  Time is sequential ("arbitrary");
    batch blocks are independent ("parallel").

    xp_ref    : (T, Bt, 4*Hp)  precomputed x_t @ W_ih + b (hoisted projection)
    whh_ref   : (Hp, 4*Hp)     recurrent weights, bf16, f32 accumulation
    y_ref     : (T, Bt, Hp)    per-timestep hidden output (feeds next layer)
    c_out_ref : (Bt, Hp)       final cell state (resident over the time sweep)
    h_scr/c_scr : (Bt, Hp)     recurrent state carried across time chunks
    """
    t_blk = pl.program_id(1)
    T, _, Hp = y_ref.shape

    @pl.when(t_blk == 0)
    def _():
        h_scr[...] = jnp.zeros_like(h_scr)
        c_scr[...] = jnp.zeros_like(c_scr)

    whh = whh_ref[...]                     # loaded once per chunk, bf16

    def step(t, carry):
        h, c = carry                       # (Bt, Hp) f32
        gates = xp_ref[t] + jnp.dot(h.astype(whh.dtype), whh,
                                    preferred_element_type=jnp.float32)
        # Hp is a multiple of 128 -> each gate slice is whole, lane-aligned vregs.
        i_g = jax.nn.sigmoid(gates[:, 0 * Hp:1 * Hp])
        f_g = jax.nn.sigmoid(gates[:, 1 * Hp:2 * Hp])
        g_g = jnp.tanh(gates[:, 2 * Hp:3 * Hp])
        o_g = jax.nn.sigmoid(gates[:, 3 * Hp:4 * Hp])
        c_new = f_g * c + i_g * g_g        # f32 cell update
        h_new = o_g * jnp.tanh(c_new)
        y_ref[t] = h_new                   # lane-dense (Hp mult. of 128) store
        return h_new, c_new

    h_fin, c_fin = jax.lax.fori_loop(0, T, step, (h_scr[...], c_scr[...]),
                                     unroll=True)
    h_scr[...] = h_fin
    c_scr[...] = c_fin

    @pl.when(t_blk == pl.num_programs(1) - 1)
    def _():
        c_out_ref[...] = c_fin


def lstm_recurrence(x_proj, whh_bf16, *, time_chunk, batch_tile):
    """x_proj: (S, Bp, 4*Hp) f32, whh_bf16: (Hp, 4*Hp) bf16 -> (y, c_n)."""
    S, Bp, G = x_proj.shape
    Hp = G // 4
    T, Bt = time_chunk, batch_tile
    assert S % T == 0 and Bp % Bt == 0 and Bt % _SUBLANES == 0 and Hp % _LANES == 0

    y, c_n = pl.pallas_call(
        _lstm_recurrence_kernel,
        out_shape=(
            jax.ShapeDtypeStruct((S, Bp, Hp), jnp.float32),
            jax.ShapeDtypeStruct((Bp, Hp), jnp.float32),
        ),
        grid_spec=pltpu.PrefetchScalarGridSpec(
            num_scalar_prefetch=0,
            grid=(Bp // Bt, S // T),
            in_specs=[
                pl.BlockSpec((T, Bt, G), lambda b, t: (t, b, 0)),   # x_proj chunk
                pl.BlockSpec((Hp, G), lambda b, t: (0, 0)),         # W_hh (invariant)
            ],
            out_specs=[
                pl.BlockSpec((T, Bt, Hp), lambda b, t: (t, b, 0)),  # y chunk
                pl.BlockSpec((Bt, Hp), lambda b, t: (b, 0)),        # final cell
            ],
            scratch_shapes=[
                pltpu.VMEM((Bt, Hp), jnp.float32),                  # h state
                pltpu.VMEM((Bt, Hp), jnp.float32),                  # c state
            ],
        ),
        compiler_params=pltpu.CompilerParams(
            dimension_semantics=("parallel", "arbitrary")),
    )(x_proj, whh_bf16)
    return y, c_n


# ---------------------------------------------------------------------------
# Parameters (PyTorch-like init) and forward pass
# ---------------------------------------------------------------------------
def init_encoder_params(key, input_dim, embedding_dim, hidden_dim, num_layers):
    keys = jax.random.split(key, 1 + 4 * num_layers)
    params = {"embedding": jax.random.normal(
        keys[0], (input_dim, embedding_dim), jnp.float32)}
    bound = float(hidden_dim) ** -0.5
    layers = []
    for layer in range(num_layers):
        e_in = embedding_dim if layer == 0 else hidden_dim
        k0, k1, k2, k3 = keys[1 + 4 * layer: 1 + 4 * (layer + 1)]
        # stored pre-transposed: (E_in, 4H) and (H, 4H); gate order i, f, g, o
        wih = jax.random.uniform(k0, (e_in, 4 * hidden_dim), jnp.float32,
                                 -bound, bound)
        whh = jax.random.uniform(k1, (hidden_dim, 4 * hidden_dim), jnp.float32,
                                 -bound, bound)
        b_ih = jax.random.uniform(k2, (4 * hidden_dim,), jnp.float32, -bound, bound)
        b_hh = jax.random.uniform(k3, (4 * hidden_dim,), jnp.float32, -bound, bound)
        layers.append({"wih": wih, "whh": whh, "b": b_ih + b_hh})
    params["lstm"] = layers
    return params


def encoder_forward(src, params, hidden_dim, *, batch_tile=8, max_time_chunk=32):
    """src: (B, S) int32 token ids.  Returns (hidden, cell), each (L, B, H)."""
    B, S = src.shape
    H = hidden_dim
    Hp = _round_up(H, _LANES)               # lane-dense gates / outputs
    Bp = _round_up(B, batch_tile)           # sublane-aligned batch
    Bt = batch_tile
    T = _choose_time_chunk(S, Bt, Hp, max_chunk=max_time_chunk)

    embedded = jnp.take(params["embedding"], src, axis=0)        # (B, S, E) glue gather
    x_tm = jnp.transpose(embedded, (1, 0, 2)).astype(jnp.float32)  # (S, B, E) time-major
    x_tm = jnp.pad(x_tm, ((0, 0), (0, Bp - B), (0, 0)))          # pad batch rows

    hiddens, cells = [], []
    for layer_params in params["lstm"]:
        wih, whh, b = layer_params["wih"], layer_params["whh"], layer_params["b"]
        e_in = wih.shape[0]
        # Zero-pad each gate block H -> Hp (keeps padded lanes exactly 0).
        wih_p = _pad_gate_cols(wih, H, Hp)                       # (E_in, 4Hp)
        b_p = _pad_gate_cols(b, H, Hp)                           # (4Hp,)
        whh_p = jnp.pad(_pad_gate_cols(whh, H, Hp),
                        ((0, Hp - H), (0, 0)))                   # (Hp, 4Hp)
        if x_tm.shape[-1] != e_in:                               # deeper layers see Hp feats
            wih_p = jnp.pad(wih_p, ((0, x_tm.shape[-1] - e_in), (0, 0)))

        # Hoisted input projection: one big (S*Bp, E) x (E, 4Hp) matmul over all
        # timesteps instead of S tiny matmuls inside the sequential loop.
        x_proj = jnp.einsum("sbe,eg->sbg", x_tm, wih_p,
                            preferred_element_type=jnp.float32) + b_p

        y, c_n = lstm_recurrence(x_proj, whh_p.astype(jnp.bfloat16),
                                 time_chunk=T, batch_tile=Bt)

        hiddens.append(y[S - 1, :B, :H])     # h_n == last timestep of y
        cells.append(c_n[:B, :H])
        x_tm = y                             # padded (S, Bp, Hp) feeds next layer

    hidden = jnp.stack(hiddens, axis=0)      # (L, B, H)
    cell = jnp.stack(cells, axis=0)          # (L, B, H)
    return hidden, cell


# ---------------------------------------------------------------------------
# Pure-JAX reference (full f32, true PyTorch LSTM semantics) for validation
# ---------------------------------------------------------------------------
def encoder_reference(src, params, hidden_dim):
    H = hidden_dim
    B = src.shape[0]
    x = jnp.transpose(jnp.take(params["embedding"], src, axis=0), (1, 0, 2))
    hiddens, cells = [], []
    for lp in params["lstm"]:
        wih, whh, b = lp["wih"], lp["whh"], lp["b"]

        def step(carry, x_t, wih=wih, whh=whh, b=b):
            h, c = carry
            g = x_t @ wih + h @ whh + b
            i = jax.nn.sigmoid(g[:, :H])
            f = jax.nn.sigmoid(g[:, H:2 * H])
            gg = jnp.tanh(g[:, 2 * H:3 * H])
            o = jax.nn.sigmoid(g[:, 3 * H:])
            c = f * c + i * gg
            h = o * jnp.tanh(c)
            return (h, c), h

        init = (jnp.zeros((B, H), jnp.float32), jnp.zeros((B, H), jnp.float32))
        (h, c), y = jax.lax.scan(step, init, x)
        hiddens.append(h)
        cells.append(c)
        x = y
    return jnp.stack(hiddens, axis=0), jnp.stack(cells, axis=0)


if __name__ == "__main__":
    INPUT_DIM = 32       # vocab size
    EMBEDDING_DIM = 16
    HIDDEN_DIM = 32
    NUM_LAYERS = 2
    BATCH = 2
    SEQ = 8

    key = jax.random.PRNGKey(0)
    k_param, k_src = jax.random.split(key)
    params = init_encoder_params(k_param, INPUT_DIM, EMBEDDING_DIM,
                                 HIDDEN_DIM, NUM_LAYERS)
    src = jax.random.randint(k_src, (BATCH, SEQ), 0, INPUT_DIM, dtype=jnp.int32)

    fwd = jax.jit(functools.partial(encoder_forward, hidden_dim=HIDDEN_DIM))
    hidden, cell = fwd(src, params)
    hidden = jax.block_until_ready(hidden)
    cell = jax.block_until_ready(cell)

    assert hidden.shape == (NUM_LAYERS, BATCH, HIDDEN_DIM)
    assert cell.shape == (NUM_LAYERS, BATCH, HIDDEN_DIM)
    assert hidden.dtype == jnp.float32 and cell.dtype == jnp.float32

    # Validate against the full-f32 reference (bf16 W_hh => small divergence).
    h_ref, c_ref = encoder_reference(src, params, HIDDEN_DIM)
    h_err = float(jnp.max(jnp.abs(hidden - h_ref)))
    c_err = float(jnp.max(jnp.abs(cell - c_ref)))
    assert h_err < 5e-2 and c_err < 5e-2, (h_err, c_err)

    print("KERNEL_OK")
</pallas_src>

<mosaic_0001>
module attributes {stable_mosaic.version = 11 : i64} {
  func.func @_lstm_recurrence_kernel(%arg0: i32, %arg1: i32, %arg2: memref<8x8x512xf32, #tpu.memory_space<vmem>>, %arg3: memref<128x512xbf16, #tpu.memory_space<vmem>>, %arg4: memref<8x8x128xf32, #tpu.memory_space<vmem>>, %arg5: memref<8x128xf32, #tpu.memory_space<vmem>>, %arg6: memref<8x128xf32, #tpu.memory_space<vmem>>, %arg7: memref<8x128xf32, #tpu.memory_space<vmem>>) attributes {dimension_semantics = [#tpu.dimension_semantics<parallel>, #tpu.dimension_semantics<arbitrary>], iteration_bounds = array<i64: 1, 1>, scalar_prefetch = 0 : i64, scratch_operands = 2 : i64, tpu.core_type = #tpu.core_type<tc>, window_params = [{transform_indices = @transform_0, window_bounds = array<i64: 8, 8, 512>}, {pipeline_mode = #tpu.pipeline_mode<synchronous>, transform_indices = @transform_1, window_bounds = array<i64: 128, 512>}, {transform_indices = @transform_2, window_bounds = array<i64: 8, 8, 128>}, {transform_indices = @transform_3, window_bounds = array<i64: 8, 128>}]} {
    %c0_i32 = arith.constant 0 : i32
    %0 = arith.cmpi eq, %arg1, %c0_i32 : i32
    %1 = arith.extui %0 : i1 to i32
    %c0_i32_0 = arith.constant 0 : i32
    %2 = arith.cmpi ne, %1, %c0_i32_0 : i32
    scf.if %2 {
      %cst_76 = arith.constant 0.000000e+00 : f32
      %291 = vector.broadcast %cst_76 : f32 to vector<8x128xf32>
      %c0_77 = arith.constant 0 : index
      %c0_78 = arith.constant 0 : index
      %292 = vector.load %arg6[%c0_77, %c0_78] : memref<8x128xf32, #tpu.memory_space<vmem>>, vector<8x128xf32>
      tpu.vector_store %arg6[%c0_77, %c0_78], %291 {strides = array<i32>} : memref<8x128xf32, #tpu.memory_space<vmem>>, vector<8x128xf32>,
      %cst_79 = arith.constant 0.000000e+00 : f32
      %293 = vector.broadcast %cst_79 : f32 to vector<8x128xf32>
      %c0_80 = arith.constant 0 : index
      %c0_81 = arith.constant 0 : index
      %294 = vector.load %arg7[%c0_80, %c0_81] : memref<8x128xf32, #tpu.memory_space<vmem>>, vector<8x128xf32>
      tpu.vector_store %arg7[%c0_80, %c0_81], %293 {strides = array<i32>} : memref<8x128xf32, #tpu.memory_space<vmem>>, vector<8x128xf32>,
    } else {
    }
    %c0 = arith.constant 0 : index
    %c0_1 = arith.constant 0 : index
    %3 = vector.load %arg3[%c0, %c0_1] : memref<128x512xbf16, #tpu.memory_space<vmem>>, vector<128x512xbf16>
    %c0_2 = arith.constant 0 : index
    %c0_3 = arith.constant 0 : index
    %4 = vector.load %arg6[%c0_2, %c0_3] : memref<8x128xf32, #tpu.memory_space<vmem>>, vector<8x128xf32>
    %c0_4 = arith.constant 0 : index
    %c0_5 = arith.constant 0 : index
    %5 = vector.load %arg7[%c0_4, %c0_5] : memref<8x128xf32, #tpu.memory_space<vmem>>, vector<8x128xf32>
    %c0_i32_6 = arith.constant 0 : i32
    %6 = arith.index_cast %c0_i32_6 : i32 to index
    %c0_7 = arith.constant 0 : index
    %c0_8 = arith.constant 0 : index
    %7 = vector.load %arg2[%6, %c0_7, %c0_8] : memref<8x8x512xf32, #tpu.memory_space<vmem>>, vector<1x8x512xf32>
    %8 = vector.shape_cast %7 : vector<1x8x512xf32> to vector<8x512xf32>
    %9 = arith.truncf %4 : vector<8x128xf32> to vector<8x128xbf16>
    %cst = arith.constant dense<0.000000e+00> : vector<8x512xf32>
    %10 = tpu.matmul %9, %3, %cst {dimension_numbers = #tpu.dot_dimension_numbers<[1], [0], [0], [1], [0, 0, 1, 1], [], []>} : vector<8x128xbf16>, vector<128x512xbf16>, vector<8x512xf32> -> vector<8x512xf32>
    %11 = arith.addf %8, %10 : vector<8x512xf32>
    %12 = vector.extract_strided_slice %11 {offsets = [0, 0], sizes = [8, 128], strides = [1, 1]} : vector<8x512xf32> to vector<8x128xf32>
    %13 = arith.negf %12 : vector<8x128xf32>
    %14 = math.exp %13 : vector<8x128xf32>
    %cst_9 = arith.constant 1.000000e+00 : f32
    %15 = vector.broadcast %cst_9 : f32 to vector<8x128xf32>
    %16 = arith.addf %15, %14 : vector<8x128xf32>
    %17 = arith.divf %15, %16 : vector<8x128xf32>
    %18 = vector.extract_strided_slice %11 {offsets = [0, 128], sizes = [8, 128], strides = [1, 1]} : vector<8x512xf32> to vector<8x128xf32>
    %19 = arith.negf %18 : vector<8x128xf32>
    %20 = math.exp %19 : vector<8x128xf32>
    %cst_10 = arith.constant 1.000000e+00 : f32
    %21 = vector.broadcast %cst_10 : f32 to vector<8x128xf32>
    %22 = arith.addf %21, %20 : vector<8x128xf32>
    %23 = arith.divf %21, %22 : vector<8x128xf32>
    %24 = vector.extract_strided_slice %11 {offsets = [0, 256], sizes = [8, 128], strides = [1, 1]} : vector<8x512xf32> to vector<8x128xf32>
    %25 = math.tanh %24 : vector<8x128xf32>
    %26 = vector.extract_strided_slice %11 {offsets = [0, 384], sizes = [8, 128], strides = [1, 1]} : vector<8x512xf32> to vector<8x128xf32>
    %27 = arith.negf %26 : vector<8x128xf32>
    %28 = math.exp %27 : vector<8x128xf32>
    %cst_11 = arith.constant 1.000000e+00 : f32
    %29 = vector.broadcast %cst_11 : f32 to vector<8x128xf32>
    %30 = arith.addf %29, %28 : vector<8x128xf32>
    %31 = arith.divf %29, %30 : vector<8x128xf32>
    %32 = arith.mulf %23, %5 : vector<8x128xf32>
    %33 = arith.mulf %17, %25 : vector<8x128xf32>
    %34 = arith.addf %32, %33 : vector<8x128xf32>
    %35 = math.tanh %34 : vector<8x128xf32>
    %36 = arith.mulf %31, %35 : vector<8x128xf32>
    %37 = arith.index_cast %c0_i32_6 : i32 to index
    %c0_12 = arith.constant 0 : index
    %c0_13 = arith.constant 0 : index
    %38 = vector.load %arg4[%37, %c0_12, %c0_13] : memref<8x8x128xf32, #tpu.memory_space<vmem>>, vector<1x8x128xf32>
    %39 = vector.shape_cast %38 : vector<1x8x128xf32> to vector<8x128xf32>
    %40 = vector.shape_cast %36 : vector<8x128xf32> to vector<1x8x128xf32>
    tpu.vector_store %arg4[%37, %c0_12, %c0_13], %40 {strides = array<i32>} : memref<8x8x128xf32, #tpu.memory_space<vmem>>, vector<1x8x128xf32>,
    %c1_i32 = arith.constant 1 : i32
    %41 = arith.index_cast %c1_i32 : i32 to index
    %c0_14 = arith.constant 0 : index
    %c0_15 = arith.constant 0 : index
    %42 = vector.load %arg2[%41, %c0_14, %c0_15] : memref<8x8x512xf32, #tpu.memory_space<vmem>>, vector<1x8x512xf32>
    %43 = vector.shape_cast %42 : vector<1x8x512xf32> to vector<8x512xf32>
    %44 = arith.truncf %36 : vector<8x128xf32> to vector<8x128xbf16>
    %cst_16 = arith.constant dense<0.000000e+00> : vector<8x512xf32>
    %45 = tpu.matmul %44, %3, %cst_16 {dimension_numbers = #tpu.dot_dimension_numbers<[1], [0], [0], [1], [0, 0, 1, 1], [], []>} : vector<8x128xbf16>, vector<128x512xbf16>, vector<8x512xf32> -> vector<8x512xf32>
    %46 = arith.addf %43, %45 : vector<8x512xf32>
    %47 = vector.extract_strided_slice %46 {offsets = [0, 0], sizes = [8, 128], strides = [1, 1]} : vector<8x512xf32> to vector<8x128xf32>
    %48 = arith.negf %47 : vector<8x128xf32>
    %49 = math.exp %48 : vector<8x128xf32>
    %cst_17 = arith.constant 1.000000e+00 : f32
    %50 = vector.broadcast %cst_17 : f32 to vector<8x128xf32>
    %51 = arith.addf %50, %49 : vector<8x128xf32>
    %52 = arith.divf %50, %51 : vector<8x128xf32>
    %53 = vector.extract_strided_slice %46 {offsets = [0, 128], sizes = [8, 128], strides = [1, 1]} : vector<8x512xf32> to vector<8x128xf32>
    %54 = arith.negf %53 : vector<8x128xf32>
    %55 = math.exp %54 : vector<8x128xf32>
    %cst_18 = arith.constant 1.000000e+00 : f32
    %56 = vector.broadcast %cst_18 : f32 to vector<8x128xf32>
    %57 = arith.addf %56, %55 : vector<8x128xf32>
    %58 = arith.divf %56, %57 : vector<8x128xf32>
    %59 = vector.extract_strided_slice %46 {offsets = [0, 256], sizes = [8, 128], strides = [1, 1]} : vector<8x512xf32> to vector<8x128xf32>
    %60 = math.tanh %59 : vector<8x128xf32>
    %61 = vector.extract_strided_slice %46 {offsets = [0, 384], sizes = [8, 128], strides = [1, 1]} : vector<8x512xf32> to vector<8x128xf32>
    %62 = arith.negf %61 : vector<8x128xf32>
    %63 = math.exp %62 : vector<8x128xf32>
    %cst_19 = arith.constant 1.000000e+00 : f32
    %64 = vector.broadcast %cst_19 : f32 to vector<8x128xf32>
    %65 = arith.addf %64, %63 : vector<8x128xf32>
    %66 = arith.divf %64, %65 : vector<8x128xf32>
    %67 = arith.mulf %58, %34 : vector<8x128xf32>
    %68 = arith.mulf %52, %60 : vector<8x128xf32>
    %69 = arith.addf %67, %68 : vector<8x128xf32>
    %70 = math.tanh %69 : vector<8x128xf32>
    %71 = arith.mulf %66, %70 : vector<8x128xf32>
    %72 = arith.index_cast %c1_i32 : i32 to index
    %c0_20 = arith.constant 0 : index
    %c0_21 = arith.constant 0 : index
    %73 = vector.load %arg4[%72, %c0_20, %c0_21] : memref<8x8x128xf32, #tpu.memory_space<vmem>>, vector<1x8x128xf32>
    %74 = vector.shape_cast %73 : vector<1x8x128xf32> to vector<8x128xf32>
    %75 = vector.shape_cast %71 : vector<8x128xf32> to vector<1x8x128xf32>
    tpu.vector_store %arg4[%72, %c0_20, %c0_21], %75 {strides = array<i32>} : memref<8x8x128xf32, #tpu.memory_space<vmem>>, vector<1x8x128xf32>,
    %c2_i32 = arith.constant 2 : i32
    %76 = arith.index_cast %c2_i32 : i32 to index
    %c0_22 = arith.constant 0 : index
    %c0_23 = arith.constant 0 : index
    %77 = vector.load %arg2[%76, %c0_22, %c0_23] : memref<8x8x512xf32, #tpu.memory_space<vmem>>, vector<1x8x512xf32>
    %78 = vector.shape_cast %77 : vector<1x8x512xf32> to vector<8x512xf32>
    %79 = arith.truncf %71 : vector<8x128xf32> to vector<8x128xbf16>
    %cst_24 = arith.constant dense<0.000000e+00> : vector<8x512xf32>
    %80 = tpu.matmul %79, %3, %cst_24 {dimension_numbers = #tpu.dot_dimension_numbers<[1], [0], [0], [1], [0, 0, 1, 1], [], []>} : vector<8x128xbf16>, vector<128x512xbf16>, vector<8x512xf32> -> vector<8x512xf32>
    %81 = arith.addf %78, %80 : vector<8x512xf32>
    %82 = vector.extract_strided_slice %81 {offsets = [0, 0], sizes = [8, 128], strides = [1, 1]} : vector<8x512xf32> to vector<8x128xf32>
    %83 = arith.negf %82 : vector<8x128xf32>
    %84 = math.exp %83 : vector<8x128xf32>
    %cst_25 = arith.constant 1.000000e+00 : f32
    %85 = vector.broadcast %cst_25 : f32 to vector<8x128xf32>
    %86 = arith.addf %85, %84 : vector<8x128xf32>
    %87 = arith.divf %85, %86 : vector<8x128xf32>
    %88 = vector.extract_strided_slice %81 {offsets = [0, 128], sizes = [8, 128], strides = [1, 1]} : vector<8x512xf32> to vector<8x128xf32>
    %89 = arith.negf %88 : vector<8x128xf32>
    %90 = math.exp %89 : vector<8x128xf32>
    %cst_26 = arith.constant 1.000000e+00 : f32
    %91 = vector.broadcast %cst_26 : f32 to vector<8x128xf32>
    %92 = arith.addf %91, %90 : vector<8x128xf32>
    %93 = arith.divf %91, %92 : vector<8x128xf32>
    %94 = vector.extract_strided_slice %81 {offsets = [0, 256], sizes = [8, 128], strides = [1, 1]} : vector<8x512xf32> to vector<8x128xf32>
    %95 = math.tanh %94 : vector<8x128xf32>
    %96 = vector.extract_strided_slice %81 {offsets = [0, 384], sizes = [8, 128], strides = [1, 1]} : vector<8x512xf32> to vector<8x128xf32>
    %97 = arith.negf %96 : vector<8x128xf32>
    %98 = math.exp %97 : vector<8x128xf32>
    %cst_27 = arith.constant 1.000000e+00 : f32
    %99 = vector.broadcast %cst_27 : f32 to vector<8x128xf32>
    %100 = arith.addf %99, %98 : vector<8x128xf32>
    %101 = arith.divf %99, %100 : vector<8x128xf32>
    %102 = arith.mulf %93, %69 : vector<8x128xf32>
    %103 = arith.mulf %87, %95 : vector<8x128xf32>
    %104 = arith.addf %102, %103 : vector<8x128xf32>
    %105 = math.tanh %104 : vector<8x128xf32>
    %106 = arith.mulf %101, %105 : vector<8x128xf32>
    %107 = arith.index_cast %c2_i32 : i32 to index
    %c0_28 = arith.constant 0 : index
    %c0_29 = arith.constant 0 : index
    %108 = vector.load %arg4[%107, %c0_28, %c0_29] : memref<8x8x128xf32, #tpu.memory_space<vmem>>, vector<1x8x128xf32>
    %109 = vector.shape_cast %108 : vector<1x8x128xf32> to vector<8x128xf32>
    %110 = vector.shape_cast %106 : vector<8x128xf32> to vector<1x8x128xf32>
    tpu.vector_store %arg4[%107, %c0_28, %c0_29], %110 {strides = array<i32>} : memref<8x8x128xf32, #tpu.memory_space<vmem>>, vector<1x8x128xf32>,
    %c3_i32 = arith.constant 3 : i32
    %111 = arith.index_cast %c3_i32 : i32 to index
    %c0_30 = arith.constant 0 : index
    %c0_31 = arith.constant 0 : index
    %112 = vector.load %arg2[%111, %c0_30, %c0_31] : memref<8x8x512xf32, #tpu.memory_space<vmem>>, vector<1x8x512xf32>
    %113 = vector.shape_cast %112 : vector<1x8x512xf32> to vector<8x512xf32>
    %114 = arith.truncf %106 : vector<8x128xf32> to vector<8x128xbf16>
    %cst_32 = arith.constant dense<0.000000e+00> : vector<8x512xf32>
    %115 = tpu.matmul %114, %3, %cst_32 {dimension_numbers = #tpu.dot_dimension_numbers<[1], [0], [0], [1], [0, 0, 1, 1], [], []>} : vector<8x128xbf16>, vector<128x512xbf16>, vector<8x512xf32> -> vector<8x512xf32>
    %116 = arith.addf %113, %115 : vector<8x512xf32>
    %117 = vector.extract_strided_slice %116 {offsets = [0, 0], sizes = [8, 128], strides = [1, 1]} : vector<8x512xf32> to vector<8x128xf32>
    %118 = arith.negf %117 : vector<8x128xf32>
    %119 = math.exp %118 : vector<8x128xf32>
    %cst_33 = arith.constant 1.000000e+00 : f32
    %120 = vector.broadcast %cst_33 : f32 to vector<8x128xf32>
    %121 = arith.addf %120, %119 : vector<8x128xf32>
    %122 = arith.divf %120, %121 : vector<8x128xf32>
    %123 = vector.extract_strided_slice %116 {offsets = [0, 128], sizes = [8, 128], strides = [1, 1]} : vector<8x512xf32> to vector<8x128xf32>
    %124 = arith.negf %123 : vector<8x128xf32>
    %125 = math.exp %124 : vector<8x128xf32>
    %cst_34 = arith.constant 1.000000e+00 : f32
    %126 = vector.broadcast %cst_34 : f32 to vector<8x128xf32>
    %127 = arith.addf %126, %125 : vector<8x128xf32>
    %128 = arith.divf %126, %127 : vector<8x128xf32>
    %129 = vector.extract_strided_slice %116 {offsets = [0, 256], sizes = [8, 128], strides = [1, 1]} : vector<8x512xf32> to vector<8x128xf32>
    %130 = math.tanh %129 : vector<8x128xf32>
    %131 = vector.extract_strided_slice %116 {offsets = [0, 384], sizes = [8, 128], strides = [1, 1]} : vector<8x512xf32> to vector<8x128xf32>
    %132 = arith.negf %131 : vector<8x128xf32>
    %133 = math.exp %132 : vector<8x128xf32>
    %cst_35 = arith.constant 1.000000e+00 : f32
    %134 = vector.broadcast %cst_35 : f32 to vector<8x128xf32>
    %135 = arith.addf %134, %133 : vector<8x128xf32>
    %136 = arith.divf %134, %135 : vector<8x128xf32>
    %137 = arith.mulf %128, %104 : vector<8x128xf32>
    %138 = arith.mulf %122, %130 : vector<8x128xf32>
    %139 = arith.addf %137, %138 : vector<8x128xf32>
    %140 = math.tanh %139 : vector<8x128xf32>
    %141 = arith.mulf %136, %140 : vector<8x128xf32>
    %142 = arith.index_cast %c3_i32 : i32 to index
    %c0_36 = arith.constant 0 : index
    %c0_37 = arith.constant 0 : index
    %143 = vector.load %arg4[%142, %c0_36, %c0_37] : memref<8x8x128xf32, #tpu.memory_space<vmem>>, vector<1x8x128xf32>
    %144 = vector.shape_cast %143 : vector<1x8x128xf32> to vector<8x128xf32>
    %145 = vector.shape_cast %141 : vector<8x128xf32> to vector<1x8x128xf32>
    tpu.vector_store %arg4[%142, %c0_36, %c0_37], %145 {strides = array<i32>} : memref<8x8x128xf32, #tpu.memory_space<vmem>>, vector<1x8x128xf32>,
    %c4_i32 = arith.constant 4 : i32
    %146 = arith.index_cast %c4_i32 : i32 to index
    %c0_38 = arith.constant 0 : index
    %c0_39 = arith.constant 0 : index
    %147 = vector.load %arg2[%146, %c0_38, %c0_39] : memref<8x8x512xf32, #tpu.memory_space<vmem>>, vector<1x8x512xf32>
    %148 = vector.shape_cast %147 : vector<1x8x512xf32> to vector<8x512xf32>
    %149 = arith.truncf %141 : vector<8x128xf32> to vector<8x128xbf16>
    %cst_40 = arith.constant dense<0.000000e+00> : vector<8x512xf32>
    %150 = tpu.matmul %149, %3, %cst_40 {dimension_numbers = #tpu.dot_dimension_numbers<[1], [0], [0], [1], [0, 0, 1, 1], [], []>} : vector<8x128xbf16>, vector<128x512xbf16>, vector<8x512xf32> -> vector<8x512xf32>
    %151 = arith.addf %148, %150 : vector<8x512xf32>
    %152 = vector.extract_strided_slice %151 {offsets = [0, 0], sizes = [8, 128], strides = [1, 1]} : vector<8x512xf32> to vector<8x128xf32>
    %153 = arith.negf %152 : vector<8x128xf32>
    %154 = math.exp %153 : vector<8x128xf32>
    %cst_41 = arith.constant 1.000000e+00 : f32
    %155 = vector.broadcast %cst_41 : f32 to vector<8x128xf32>
    %156 = arith.addf %155, %154 : vector<8x128xf32>
    %157 = arith.divf %155, %156 : vector<8x128xf32>
    %158 = vector.extract_strided_slice %151 {offsets = [0, 128], sizes = [8, 128], strides = [1, 1]} : vector<8x512xf32> to vector<8x128xf32>
    %159 = arith.negf %158 : vector<8x128xf32>
    %160 = math.exp %159 : vector<8x128xf32>
    %cst_42 = arith.constant 1.000000e+00 : f32
    %161 = vector.broadcast %cst_42 : f32 to vector<8x128xf32>
    %162 = arith.addf %161, %160 : vector<8x128xf32>
    %163 = arith.divf %161, %162 : vector<8x128xf32>
    %164 = vector.extract_strided_slice %151 {offsets = [0, 256], sizes = [8, 128], strides = [1, 1]} : vector<8x512xf32> to vector<8x128xf32>
    %165 = math.tanh %164 : vector<8x128xf32>
    %166 = vector.extract_strided_slice %151 {offsets = [0, 384], sizes = [8, 128], strides = [1, 1]} : vector<8x512xf32> to vector<8x128xf32>
    %167 = arith.negf %166 : vector<8x128xf32>
    %168 = math.exp %167 : vector<8x128xf32>
    %cst_43 = arith.constant 1.000000e+00 : f32
    %169 = vector.broadcast %cst_43 : f32 to vector<8x128xf32>
    %170 = arith.addf %169, %168 : vector<8x128xf32>
    %171 = arith.divf %169, %170 : vector<8x128xf32>
    %172 = arith.mulf %163, %139 : vector<8x128xf32>
    %173 = arith.mulf %157, %165 : vector<8x128xf32>
    %174 = arith.addf %172, %173 : vector<8x128xf32>
    %175 = math.tanh %174 : vector<8x128xf32>
    %176 = arith.mulf %171, %175 : vector<8x128xf32>
    %177 = arith.index_cast %c4_i32 : i32 to index
    %c0_44 = arith.constant 0 : index
    %c0_45 = arith.constant 0 : index
    %178 = vector.load %arg4[%177, %c0_44, %c0_45] : memref<8x8x128xf32, #tpu.memory_space<vmem>>, vector<1x8x128xf32>
    %179 = vector.shape_cast %178 : vector<1x8x128xf32> to vector<8x128xf32>
    %180 = vector.shape_cast %176 : vector<8x128xf32> to vector<1x8x128xf32>
    tpu.vector_store %arg4[%177, %c0_44, %c0_45], %180 {strides = array<i32>} : memref<8x8x128xf32, #tpu.memory_space<vmem>>, vector<1x8x128xf32>,
    %c5_i32 = arith.constant 5 : i32
    %181 = arith.index_cast %c5_i32 : i32 to index
    %c0_46 = arith.constant 0 : index
    %c0_47 = arith.constant 0 : index
    %182 = vector.load %arg2[%181, %c0_46, %c0_47] : memref<8x8x512xf32, #tpu.memory_space<vmem>>, vector<1x8x512xf32>
    %183 = vector.shape_cast %182 : vector<1x8x512xf32> to vector<8x512xf32>
    %184 = arith.truncf %176 : vector<8x128xf32> to vector<8x128xbf16>
    %cst_48 = arith.constant dense<0.000000e+00> : vector<8x512xf32>
    %185 = tpu.matmul %184, %3, %cst_48 {dimension_numbers = #tpu.dot_dimension_numbers<[1], [0], [0], [1], [0, 0, 1, 1], [], []>} : vector<8x128xbf16>, vector<128x512xbf16>, vector<8x512xf32> -> vector<8x512xf32>
    %186 = arith.addf %183, %185 : vector<8x512xf32>
    %187 = vector.extract_strided_slice %186 {offsets = [0, 0], sizes = [8, 128], strides = [1, 1]} : vector<8x512xf32> to vector<8x128xf32>
    %188 = arith.negf %187 : vector<8x128xf32>
    %189 = math.exp %188 : vector<8x128xf32>
    %cst_49 = arith.constant 1.000000e+00 : f32
    %190 = vector.broadcast %cst_49 : f32 to vector<8x128xf32>
    %191 = arith.addf %190, %189 : vector<8x128xf32>
    %192 = arith.divf %190, %191 : vector<8x128xf32>
    %193 = vector.extract_strided_slice %186 {offsets = [0, 128], sizes = [8, 128], strides = [1, 1]} : vector<8x512xf32> to vector<8x128xf32>
    %194 = arith.negf %193 : vector<8x128xf32>
    %195 = math.exp %194 : vector<8x128xf32>
    %cst_50 = arith.constant 1.000000e+00 : f32
    %196 = vector.broadcast %cst_50 : f32 to vector<8x128xf32>
    %197 = arith.addf %196, %195 : vector<8x128xf32>
    %198 = arith.divf %196, %197 : vector<8x128xf32>
    %199 = vector.extract_strided_slice %186 {offsets = [0, 256], sizes = [8, 128], strides = [1, 1]} : vector<8x512xf32> to vector<8x128xf32>
    %200 = math.tanh %199 : vector<8x128xf32>
    %201 = vector.extract_strided_slice %186 {offsets = [0, 384], sizes = [8, 128], strides = [1, 1]} : vector<8x512xf32> to vector<8x128xf32>
    %202 = arith.negf %201 : vector<8x128xf32>
    %203 = math.exp %202 : vector<8x128xf32>
    %cst_51 = arith.constant 1.000000e+00 : f32
    %204 = vector.broadcast %cst_51 : f32 to vector<8x128xf32>
    %205 = arith.addf %204, %203 : vector<8x128xf32>
    %206 = arith.divf %204, %205 : vector<8x128xf32>
    %207 = arith.mulf %198, %174 : vector<8x128xf32>
    %208 = arith.mulf %192, %200 : vector<8x128xf32>
    %209 = arith.addf %207, %208 : vector<8x128xf32>
    %210 = math.tanh %209 : vector<8x128xf32>
    %211 = arith.mulf %206, %210 : vector<8x128xf32>
    %212 = arith.index_cast %c5_i32 : i32 to index
    %c0_52 = arith.constant 0 : index
    %c0_53 = arith.constant 0 : index
    %213 = vector.load %arg4[%212, %c0_52, %c0_53] : memref<8x8x128xf32, #tpu.memory_space<vmem>>, vector<1x8x128xf32>
    %214 = vector.shape_cast %213 : vector<1x8x128xf32> to vector<8x128xf32>
    %215 = vector.shape_cast %211 : vector<8x128xf32> to vector<1x8x128xf32>
    tpu.vector_store %arg4[%212, %c0_52, %c0_53], %215 {strides = array<i32>} : memref<8x8x128xf32, #tpu.memory_space<vmem>>, vector<1x8x128xf32>,
    %c6_i32 = arith.constant 6 : i32
    %216 = arith.index_cast %c6_i32 : i32 to index
    %c0_54 = arith.constant 0 : index
    %c0_55 = arith.constant 0 : index
    %217 = vector.load %arg2[%216, %c0_54, %c0_55] : memref<8x8x512xf32, #tpu.memory_space<vmem>>, vector<1x8x512xf32>
    %218 = vector.shape_cast %217 : vector<1x8x512xf32> to vector<8x512xf32>
    %219 = arith.truncf %211 : vector<8x128xf32> to vector<8x128xbf16>
    %cst_56 = arith.constant dense<0.000000e+00> : vector<8x512xf32>
    %220 = tpu.matmul %219, %3, %cst_56 {dimension_numbers = #tpu.dot_dimension_numbers<[1], [0], [0], [1], [0, 0, 1, 1], [], []>} : vector<8x128xbf16>, vector<128x512xbf16>, vector<8x512xf32> -> vector<8x512xf32>
    %221 = arith.addf %218, %220 : vector<8x512xf32>
    %222 = vector.extract_strided_slice %221 {offsets = [0, 0], sizes = [8, 128], strides = [1, 1]} : vector<8x512xf32> to vector<8x128xf32>
    %223 = arith.negf %222 : vector<8x128xf32>
    %224 = math.exp %223 : vector<8x128xf32>
    %cst_57 = arith.constant 1.000000e+00 : f32
    %225 = vector.broadcast %cst_57 : f32 to vector<8x128xf32>
    %226 = arith.addf %225, %224 : vector<8x128xf32>
    %227 = arith.divf %225, %226 : vector<8x128xf32>
    %228 = vector.extract_strided_slice %221 {offsets = [0, 128], sizes = [8, 128], strides = [1, 1]} : vector<8x512xf32> to vector<8x128xf32>
    %229 = arith.negf %228 : vector<8x128xf32>
    %230 = math.exp %229 : vector<8x128xf32>
    %cst_58 = arith.constant 1.000000e+00 : f32
    %231 = vector.broadcast %cst_58 : f32 to vector<8x128xf32>
    %232 = arith.addf %231, %230 : vector<8x128xf32>
    %233 = arith.divf %231, %232 : vector<8x128xf32>
    %234 = vector.extract_strided_slice %221 {offsets = [0, 256], sizes = [8, 128], strides = [1, 1]} : vector<8x512xf32> to vector<8x128xf32>
    %235 = math.tanh %234 : vector<8x128xf32>
    %236 = vector.extract_strided_slice %221 {offsets = [0, 384], sizes = [8, 128], strides = [1, 1]} : vector<8x512xf32> to vector<8x128xf32>
    %237 = arith.negf %236 : vector<8x128xf32>
    %238 = math.exp %237 : vector<8x128xf32>
    %cst_59 = arith.constant 1.000000e+00 : f32
    %239 = vector.broadcast %cst_59 : f32 to vector<8x128xf32>
    %240 = arith.addf %239, %238 : vector<8x128xf32>
    %241 = arith.divf %239, %240 : vector<8x128xf32>
    %242 = arith.mulf %233, %209 : vector<8x128xf32>
    %243 = arith.mulf %227, %235 : vector<8x128xf32>
    %244 = arith.addf %242, %243 : vector<8x128xf32>
    %245 = math.tanh %244 : vector<8x128xf32>
    %246 = arith.mulf %241, %245 : vector<8x128xf32>
    %247 = arith.index_cast %c6_i32 : i32 to index
    %c0_60 = arith.constant 0 : index
    %c0_61 = arith.constant 0 : index
    %248 = vector.load %arg4[%247, %c0_60, %c0_61] : memref<8x8x128xf32, #tpu.memory_space<vmem>>, vector<1x8x128xf32>
    %249 = vector.shape_cast %248 : vector<1x8x128xf32> to vector<8x128xf32>
    %250 = vector.shape_cast %246 : vector<8x128xf32> to vector<1x8x128xf32>
    tpu.vector_store %arg4[%247, %c0_60, %c0_61], %250 {strides = array<i32>} : memref<8x8x128xf32, #tpu.memory_space<vmem>>, vector<1x8x128xf32>,
    %c7_i32 = arith.constant 7 : i32
    %251 = arith.index_cast %c7_i32 : i32 to index
    %c0_62 = arith.constant 0 : index
    %c0_63 = arith.constant 0 : index
    %252 = vector.load %arg2[%251, %c0_62, %c0_63] : memref<8x8x512xf32, #tpu.memory_space<vmem>>, vector<1x8x512xf32>
    %253 = vector.shape_cast %252 : vector<1x8x512xf32> to vector<8x512xf32>
    %254 = arith.truncf %246 : vector<8x128xf32> to vector<8x128xbf16>
    %cst_64 = arith.constant dense<0.000000e+00> : vector<8x512xf32>
    %255 = tpu.matmul %254, %3, %cst_64 {dimension_numbers = #tpu.dot_dimension_numbers<[1], [0], [0], [1], [0, 0, 1, 1], [], []>} : vector<8x128xbf16>, vector<128x512xbf16>, vector<8x512xf32> -> vector<8x512xf32>
    %256 = arith.addf %253, %255 : vector<8x512xf32>
    %257 = vector.extract_strided_slice %256 {offsets = [0, 0], sizes = [8, 128], strides = [1, 1]} : vector<8x512xf32> to vector<8x128xf32>
    %258 = arith.negf %257 : vector<8x128xf32>
    %259 = math.exp %258 : vector<8x128xf32>
    %cst_65 = arith.constant 1.000000e+00 : f32
    %260 = vector.broadcast %cst_65 : f32 to vector<8x128xf32>
    %261 = arith.addf %260, %259 : vector<8x128xf32>
    %262 = arith.divf %260, %261 : vector<8x128xf32>
    %263 = vector.extract_strided_slice %256 {offsets = [0, 128], sizes = [8, 128], strides = [1, 1]} : vector<8x512xf32> to vector<8x128xf32>
    %264 = arith.negf %263 : vector<8x128xf32>
    %265 = math.exp %264 : vector<8x128xf32>
    %cst_66 = arith.constant 1.000000e+00 : f32
    %266 = vector.broadcast %cst_66 : f32 to vector<8x128xf32>
    %267 = arith.addf %266, %265 : vector<8x128xf32>
    %268 = arith.divf %266, %267 : vector<8x128xf32>
    %269 = vector.extract_strided_slice %256 {offsets = [0, 256], sizes = [8, 128], strides = [1, 1]} : vector<8x512xf32> to vector<8x128xf32>
    %270 = math.tanh %269 : vector<8x128xf32>
    %271 = vector.extract_strided_slice %256 {offsets = [0, 384], sizes = [8, 128], strides = [1, 1]} : vector<8x512xf32> to vector<8x128xf32>
    %272 = arith.negf %271 : vector<8x128xf32>
    %273 = math.exp %272 : vector<8x128xf32>
    %cst_67 = arith.constant 1.000000e+00 : f32
    %274 = vector.broadcast %cst_67 : f32 to vector<8x128xf32>
    %275 = arith.addf %274, %273 : vector<8x128xf32>
    %276 = arith.divf %274, %275 : vector<8x128xf32>
    %277 = arith.mulf %268, %244 : vector<8x128xf32>
    %278 = arith.mulf %262, %270 : vector<8x128xf32>
    %279 = arith.addf %277, %278 : vector<8x128xf32>
    %280 = math.tanh %279 : vector<8x128xf32>
    %281 = arith.mulf %276, %280 : vector<8x128xf32>
    %282 = arith.index_cast %c7_i32 : i32 to index
    %c0_68 = arith.constant 0 : index
    %c0_69 = arith.constant 0 : index
    %283 = vector.load %arg4[%282, %c0_68, %c0_69] : memref<8x8x128xf32, #tpu.memory_space<vmem>>, vector<1x8x128xf32>
    %284 = vector.shape_cast %283 : vector<1x8x128xf32> to vector<8x128xf32>
    %285 = vector.shape_cast %281 : vector<8x128xf32> to vector<1x8x128xf32>
    tpu.vector_store %arg4[%282, %c0_68, %c0_69], %285 {strides = array<i32>} : memref<8x8x128xf32, #tpu.memory_space<vmem>>, vector<1x8x128xf32>,
    %c8_i32 = arith.constant 8 : i32
    %c0_70 = arith.constant 0 : index
    %c0_71 = arith.constant 0 : index
    %286 = vector.load %arg6[%c0_70, %c0_71] : memref<8x128xf32, #tpu.memory_space<vmem>>, vector<8x128xf32>
    tpu.vector_store %arg6[%c0_70, %c0_71], %281 {strides = array<i32>} : memref<8x128xf32, #tpu.memory_space<vmem>>, vector<8x128xf32>,
    %c0_72 = arith.constant 0 : index
    %c0_73 = arith.constant 0 : index
    %287 = vector.load %arg7[%c0_72, %c0_73] : memref<8x128xf32, #tpu.memory_space<vmem>>, vector<8x128xf32>
    tpu.vector_store %arg7[%c0_72, %c0_73], %279 {strides = array<i32>} : memref<8x128xf32, #tpu.memory_space<vmem>>, vector<8x128xf32>,
    %c0_i32_74 = arith.constant 0 : i32
    %288 = arith.cmpi eq, %arg1, %c0_i32_74 : i32
    %289 = arith.extui %288 : i1 to i32
    %c0_i32_75 = arith.constant 0 : i32
    %290 = arith.cmpi ne, %289, %c0_i32_75 : i32
    scf.if %290 {
      %c0_76 = arith.constant 0 : index
      %c0_77 = arith.constant 0 : index
      %291 = vector.load %arg5[%c0_76, %c0_77] : memref<8x128xf32, #tpu.memory_space<vmem>>, vector<8x128xf32>
      tpu.vector_store %arg5[%c0_76, %c0_77], %279 {strides = array<i32>} : memref<8x128xf32, #tpu.memory_space<vmem>>, vector<8x128xf32>,
    } else {
    }
    return
  }
  func.func @transform_0(%arg0: i32, %arg1: i32) -> (i32, i32, i32) {
    %c0_i32 = arith.constant 0 : i32
    %c0_i32_0 = arith.constant 0 : i32
    return %arg1, %arg0, %c0_i32 : i32, i32, i32
  }
  func.func @transform_1(%arg0: i32, %arg1: i32) -> (i32, i32) {
    %c0_i32 = arith.constant 0 : i32
    %c0_i32_0 = arith.constant 0 : i32
    %c0_i32_1 = arith.constant 0 : i32
    return %c0_i32, %c0_i32_0 : i32, i32
  }
  func.func @transform_2(%arg0: i32, %arg1: i32) -> (i32, i32, i32) {
    %c0_i32 = arith.constant 0 : i32
    %c0_i32_0 = arith.constant 0 : i32
    return %arg1, %arg0, %c0_i32 : i32, i32, i32
  }
  func.func @transform_3(%arg0: i32, %arg1: i32) -> (i32, i32) {
    %c0_i32 = arith.constant 0 : i32
    %c0_i32_0 = arith.constant 0 : i32
    return %arg0, %c0_i32 : i32, i32
  }
}

</mosaic_0001>

<llo_original>
// kernel: encoder_forward.2
$region0: #{encoder_forward.2}
  #allocation0 [shape = 'u32[]', space=smem, size = 0x4, offset = 0x4, fixed_abs, tag = 'smem constant byte address 0x4 - core index']
  #allocation1 [shape = 'u32[72,128]{1,0:T(1,128)}', space=vmem, size = 0x9000, scoped, tag = 'internal scratch']
  #allocation2 [shape = 'f32[8,128]{1,0:T(8,128)}', space=vmem, size = 0x1000, scoped, tag = 'scratch operand']
  #allocation3 [shape = 'f32[8,128]{1,0:T(8,128)}', space=vmem, size = 0x1000, scoped, tag = 'scratch operand']
  %s0 = inlined_call_operand.vmem [shape: f32[8,8,512], index: 0, kind: input, shape index: {}]
  %s1 = inlined_call_operand.vmem [shape: bf16[128,512], index: 1, kind: input, shape index: {}]
  %s2 = inlined_call_operand.vmem [shape: f32[8,8,128], index: 2, kind: output, shape index: {0}]
  %s3 = inlined_call_operand.vmem [shape: f32[8,128], index: 3, kind: output, shape index: {1}]
  %4 = xla_tuple %s2, %s3
  %s5 = sld [smem:[#allocation0]]
  $region34: #{encoder_forward.2} parent=0
    _
  %s7 = ssub.s32 1, %s5
  %s8 = scalar_select 0, %s7, %s5
  // Predicated region
  $region2: #{encoder_forward.2} parent=0 // pred_check
    _
  $region3: #{encoder_forward.2} parent=0 // pred_check_branch
    %10 = sbr.rel (0) target = $region5
  $region4: #{encoder_forward.2} parent=0 // pred_region
    _
  $region5: #{encoder_forward.2} parent=0 // pred_fallthru
    _
  // Predicated region
  $region6: #{encoder_forward.2} parent=0 // pred_check
    _
  $region7: #{encoder_forward.2} parent=0 // pred_check_branch
    %12 = sbr.rel (0) target = $region9
  $region8: #{encoder_forward.2} parent=0 // pred_region
    _
  $region9: #{encoder_forward.2} parent=0 // pred_fallthru
    _
  %p13 = scmp.eq.s32.totalorder 0, 0
  // Predicated region
  $region10: #{encoder_forward.2} parent=0 // pred_check
    %p14 = pneg %p13
  $region11: #{encoder_forward.2} parent=0 // pred_check_branch
    %16 = sbr.rel (%p14) target = $region13
  $region12: #{encoder_forward.2} parent=0 // pred_region
    %17 = vst [vmem:[#allocation2] sm:$0xff] 0.0
    %18 = vst [vmem:[#allocation3] sm:$0xff] 0.0
  $region13: #{encoder_forward.2} parent=0 // pred_fallthru
    _
  %v19 = vld [vmem:[%s1] sm:$0xff]
  %v20 = vld [vmem:[%s1 + $0x8] sm:$0xff]
  %v21 = vld [vmem:[%s1 + $0x10] sm:$0xff]
  %v22 = vld [vmem:[%s1 + $0x18] sm:$0xff]
  %v23 = vld [vmem:[%s1 + $0x20] sm:$0xff]
  %v24 = vld [vmem:[%s1 + $0x28] sm:$0xff]
  %v25 = vld [vmem:[%s1 + $0x30] sm:$0xff]
  %v26 = vld [vmem:[%s1 + $0x38] sm:$0xff]
  %v27 = vld [vmem:[%s1 + $0x40] sm:$0xff]
  %v28 = vld [vmem:[%s1 + $0x48] sm:$0xff]
  %v29 = vld [vmem:[%s1 + $0x50] sm:$0xff]
  %v30 = vld [vmem:[%s1 + $0x58] sm:$0xff]
  %v31 = vld [vmem:[%s1 + $0x60] sm:$0xff]
  %v32 = vld [vmem:[%s1 + $0x68] sm:$0xff]
  %v33 = vld [vmem:[%s1 + $0x70] sm:$0xff]
  %v34 = vld [vmem:[%s1 + $0x78] sm:$0xff]
  %v35 = vld [vmem:[%s1 + $0x80] sm:$0xff]
  %v36 = vld [vmem:[%s1 + $0x88] sm:$0xff]
  %v37 = vld [vmem:[%s1 + $0x90] sm:$0xff]
  %v38 = vld [vmem:[%s1 + $0x98] sm:$0xff]
  %v39 = vld [vmem:[%s1 + $0xa0] sm:$0xff]
  %v40 = vld [vmem:[%s1 + $0xa8] sm:$0xff]
  %v41 = vld [vmem:[%s1 + $0xb0] sm:$0xff]
  %v42 = vld [vmem:[%s1 + $0xb8] sm:$0xff]
  %v43 = vld [vmem:[%s1 + $0xc0] sm:$0xff]
  %v44 = vld [vmem:[%s1 + $0xc8] sm:$0xff]
  %v45 = vld [vmem:[%s1 + $0xd0] sm:$0xff]
  %v46 = vld [vmem:[%s1 + $0xd8] sm:$0xff]
  %v47 = vld [vmem:[%s1 + $0xe0] sm:$0xff]
  %v48 = vld [vmem:[%s1 + $0xe8] sm:$0xff]
  %v49 = vld [vmem:[%s1 + $0xf0] sm:$0xff]
  %v50 = vld [vmem:[%s1 + $0xf8] sm:$0xff]
  %v51 = vld [vmem:[#allocation2] sm:$0xff]
  %v52 = vld [vmem:[#allocation3] sm:$0xff]
  %v53 = vld [vmem:[%s0] sm:$0xff]
  %v54 = vld [vmem:[%s0 + $0x8] sm:$0xff]
  %v55 = vld [vmem:[%s0 + $0x10] sm:$0xff]
  %v56 = vld [vmem:[%s0 + $0x18] sm:$0xff]
  %v57 = vpack.c.bf16 %v51, %v51
  %v90 = vunpack.c.l.b16 %v19
  %v91 = vunpack.c.h.b16 %v19
  %v92 = vunpack.c.l.b16 %v20
  %v93 = vunpack.c.h.b16 %v20
  %v94 = vunpack.c.l.b16 %v21
  %v95 = vunpack.c.h.b16 %v21
  %v96 = vunpack.c.l.b16 %v22
  %v97 = vunpack.c.h.b16 %v22
  %v98 = vunpack.c.l.b16 %v23
  %v99 = vunpack.c.h.b16 %v23
  %v100 = vunpack.c.l.b16 %v24
  %v101 = vunpack.c.h.b16 %v24
  %v102 = vunpack.c.l.b16 %v25
  %v103 = vunpack.c.h.b16 %v25
  %v104 = vunpack.c.l.b16 %v26
  %v105 = vunpack.c.h.b16 %v26
  %v106 = vunpack.c.l.b16 %v27
  %v107 = vunpack.c.h.b16 %v27
  %v108 = vunpack.c.l.b16 %v28
  %v109 = vunpack.c.h.b16 %v28
  %v110 = vunpack.c.l.b16 %v29
  %v111 = vunpack.c.h.b16 %v29
  %v112 = vunpack.c.l.b16 %v30
  %v113 = vunpack.c.h.b16 %v30
  %v114 = vunpack.c.l.b16 %v31
  %v115 = vunpack.c.h.b16 %v31
  %v116 = vunpack.c.l.b16 %v32
  %v117 = vunpack.c.h.b16 %v32
  %v118 = vunpack.c.l.b16 %v33
  %v119 = vunpack.c.h.b16 %v33
  %v120 = vunpack.c.l.b16 %v34
  %v121 = vunpack.c.h.b16 %v34
  %v122 = vunpack.c.l.b16 %v35
  %v123 = vunpack.c.h.b16 %v35
  %v124 = vunpack.c.l.b16 %v36
  %v125 = vunpack.c.h.b16 %v36
  %v126 = vunpack.c.l.b16 %v37
  %v127 = vunpack.c.h.b16 %v37
  %v128 = vunpack.c.l.b16 %v38
  %v129 = vunpack.c.h.b16 %v38
  %v130 = vunpack.c.l.b16 %v39
  %v131 = vunpack.c.h.b16 %v39
  %v132 = vunpack.c.l.b16 %v40
  %v133 = vunpack.c.h.b16 %v40
  %v134 = vunpack.c.l.b16 %v41
  %v135 = vunpack.c.h.b16 %v41
  %v136 = vunpack.c.l.b16 %v42
  %v137 = vunpack.c.h.b16 %v42
  %v138 = vunpack.c.l.b16 %v43
  %v139 = vunpack.c.h.b16 %v43
  %v140 = vunpack.c.l.b16 %v44
  %v141 = vunpack.c.h.b16 %v44
  %v142 = vunpack.c.l.b16 %v45
  %v143 = vunpack.c.h.b16 %v45
  %v144 = vunpack.c.l.b16 %v46
  %v145 = vunpack.c.h.b16 %v46
  %v146 = vunpack.c.l.b16 %v47
  %v147 = vunpack.c.h.b16 %v47
  %v148 = vunpack.c.l.b16 %v48
  %v149 = vunpack.c.h.b16 %v48
  %v150 = vunpack.c.l.b16 %v49
  %v151 = vunpack.c.h.b16 %v49
  %v152 = vunpack.c.l.b16 %v50
  %v153 = vunpack.c.h.b16 %v50
  %v154 = vpack.c.b16 %v94, %v90
  %v155 = vpack.c.b16 %v95, %v91
  %v156 = vpack.c.b16 %v96, %v92
  %v157 = vpack.c.b16 %v97, %v93
  %v158 = vpack.c.b16 %v102, %v98
  %v159 = vpack.c.b16 %v103, %v99
  %v160 = vpack.c.b16 %v104, %v100
  %v161 = vpack.c.b16 %v105, %v101
  %v162 = vpack.c.b16 %v110, %v106
  %v163 = vpack.c.b16 %v111, %v107
  %v164 = vpack.c.b16 %v112, %v108
  %v165 = vpack.c.b16 %v113, %v109
  %v166 = vpack.c.b16 %v118, %v114
  %v167 = vpack.c.b16 %v119, %v115
  %v168 = vpack.c.b16 %v120, %v116
  %v169 = vpack.c.b16 %v121, %v117
  %v170 = vpack.c.b16 %v126, %v122
  %v171 = vpack.c.b16 %v127, %v123
  %v172 = vpack.c.b16 %v128, %v124
  %v173 = vpack.c.b16 %v129, %v125
  %v174 = vpack.c.b16 %v134, %v130
  %v175 = vpack.c.b16 %v135, %v131
  %v176 = vpack.c.b16 %v136, %v132
  %v177 = vpack.c.b16 %v137, %v133
  %v178 = vpack.c.b16 %v142, %v138
  %v179 = vpack.c.b16 %v143, %v139
  %v180 = vpack.c.b16 %v144, %v140
  %v181 = vpack.c.b16 %v145, %v141
  %v182 = vpack.c.b16 %v150, %v146
  %v183 = vpack.c.b16 %v151, %v147
  %v184 = vpack.c.b16 %v152, %v148
  %v185 = vpack.c.b16 %v153, %v149
  %218 = vmatpush.bf16.msra.mxu0 %v182
  %219 = vmatpush.bf16.msra.mxu0 %v178
  %220 = vmatpush.bf16.msra.mxu0 %v174
  %221 = vmatpush.bf16.msra.mxu0 %v170
  %222 = vmatpush.bf16.msra.mxu0 %v166
  %223 = vmatpush.bf16.msra.mxu0 %v162
  %224 = vmatpush.bf16.msra.mxu0 %v158
  %225 = vmatpush.bf16.msra.mxu0 %v154
  %226 = vmatmul.bf16.gmra.mxu0 %v57
  %v227 = vpop.f32.mrf.mxu0
  %v228 = vadd.f32 0.0, %v227
  %v229 = vpop.f32.mrf.mxu0
  %230 = vdwg.mxu0
  %231 = vmatpush.bf16.msra.mxu0 %v183
  %232 = vmatpush.bf16.msra.mxu0 %v179
  %233 = vmatpush.bf16.msra.mxu0 %v175
  %234 = vmatpush.bf16.msra.mxu0 %v171
  %235 = vmatpush.bf16.msra.mxu0 %v167
  %236 = vmatpush.bf16.msra.mxu0 %v163
  %237 = vmatpush.bf16.msra.mxu0 %v159
  %238 = vmatpush.bf16.msra.mxu0 %v155
  %239 = vmatmul.bf16.gmra.mxu0 %v57
  %v240 = vpop.f32.mrf.mxu0
  %v241 = vadd.f32 0.0, %v240
  %v242 = vpop.f32.mrf.mxu0
  %243 = vdwg.mxu0
  %244 = vmatpush.bf16.msra.mxu0 %v184
  %245 = vmatpush.bf16.msra.mxu0 %v180
  %246 = vmatpush.bf16.msra.mxu0 %v176
  %247 = vmatpush.bf16.msra.mxu0 %v172
  %248 = vmatpush.bf16.msra.mxu0 %v168
  %249 = vmatpush.bf16.msra.mxu0 %v164
  %250 = vmatpush.bf16.msra.mxu0 %v160
  %251 = vmatpush.bf16.msra.mxu0 %v156
  %252 = vmatmul.bf16.gmra.mxu0 %v57
  %v253 = vpop.f32.mrf.mxu0
  %v254 = vadd.f32 0.0, %v253
  %v255 = vpop.f32.mrf.mxu0
  %256 = vdwg.mxu0
  %257 = vmatpush.bf16.msra.mxu0 %v185
  %258 = vmatpush.bf16.msra.mxu0 %v181
  %259 = vmatpush.bf16.msra.mxu0 %v177
  %260 = vmatpush.bf16.msra.mxu0 %v173
  %261 = vmatpush.bf16.msra.mxu0 %v169
  %262 = vmatpush.bf16.msra.mxu0 %v165
  %263 = vmatpush.bf16.msra.mxu0 %v161
  %264 = vmatpush.bf16.msra.mxu0 %v157
  %265 = vmatmul.bf16.gmra.mxu0 %v57
  %v266 = vpop.f32.mrf.mxu0
  %v267 = vadd.f32 0.0, %v266
  %v268 = vpop.f32.mrf.mxu0
  %269 = vdwg.mxu0
  %v270 = vadd.f32 %v53, %v228
  %v271 = vadd.f32 %v54, %v241
  %v272 = vadd.f32 %v55, %v254
  %v273 = vadd.f32 %v56, %v267
  %v274 = vxor.u32 %v270, 2147483648
  %v275 = vmul.f32 %v274, 1.442695
  %v276 = vpow.pop %v275
  %v277 = vadd.f32 %v276, 1.0
  %v278 = vrcp.pop %v277
  %v279 = vmul.f32 %v277, %v278
  %v280 = vsub.f32 1.0, %v279
  %v281 = vmul.f32 %v278, %v280
  %v282 = vadd.f32 %v278, %v281
  %vm283 = vweird.f32 %v277
  %vm284 = vweird.f32 %v278
  %vm285 = vmor %vm283, %vm284
  %v286 = vsel %vm285, %v278, %v282
  %v287 = vand.u32 2147483647, %v277
  %vm288 = vcmp.eq.f32.partialorder %v287, 8.507059e+37
  %v289 = vand.u32 %v277, 2147483648
  %v290 = vor.u32 1.1754944e-38, %v289
  %v291 = vsel %vm288, %v290, %v286
  %v292 = vmul.f32 1.0, %v291
  %v293 = vxor.u32 %v271, 2147483648
  %v294 = vmul.f32 %v293, 1.442695
  %v295 = vpow.pop %v294
  %v296 = vadd.f32 %v295, 1.0
  %v297 = vrcp.pop %v296
  %v298 = vmul.f32 %v296, %v297
  %v299 = vsub.f32 1.0, %v298
  %v300 = vmul.f32 %v297, %v299
  %v301 = vadd.f32 %v297, %v300
  %vm302 = vweird.f32 %v296
  %vm303 = vweird.f32 %v297
  %vm304 = vmor %vm302, %vm303
  %v305 = vsel %vm304, %v297, %v301
  %v306 = vand.u32 2147483647, %v296
  %vm307 = vcmp.eq.f32.partialorder %v306, 8.507059e+37
  %v308 = vand.u32 %v296, 2147483648
  %v309 = vor.u32 1.1754944e-38, %v308
  %v310 = vsel %vm307, %v309, %v305
  %v311 = vmul.f32 1.0, %v310
  %v312 = vtanh.pop %v272
  %v313 = vxor.u32 %v273, 2147483648
  %v314 = vmul.f32 %v313, 1.442695
  %v315 = vpow.pop %v314
  %v316 = vadd.f32 %v315, 1.0
  %v317 = vrcp.pop %v316
  %v318 = vmul.f32 %v316, %v317
  %v319 = vsub.f32 1.0, %v318
  %v320 = vmul.f32 %v317, %v319
  %v321 = vadd.f32 %v317, %v320
  %vm322 = vweird.f32 %v316
  %vm323 = vweird.f32 %v317
  %vm324 = vmor %vm322, %vm323
  %v325 = vsel %vm324, %v317, %v321
  %v326 = vand.u32 2147483647, %v316
  %vm327 = vcmp.eq.f32.partialorder %v326, 8.507059e+37
  %v328 = vand.u32 %v316, 2147483648
  %v329 = vor.u32 1.1754944e-38, %v328
  %v330 = vsel %vm327, %v329, %v325
  %v331 = vmul.f32 1.0, %v330
  %v332 = vmul.f32 %v311, %v52
  %v333 = vmul.f32 %v292, %v312
  %v334 = vadd.f32 %v332, %v333
  %v335 = vtanh.pop %v334
  %v336 = vmul.f32 %v331, %v335
  %337 = vst [vmem:[%s2] sm:$0xff] %v336
  %s338 = scalar_lea.vmem %s0, 32
  %v339 = vld [vmem:[%s338] sm:$0xff]
  %v340 = vld [vmem:[%s338 + $0x8] sm:$0xff]
  %v341 = vld [vmem:[%s338 + $0x10] sm:$0xff]
  %v342 = vld [vmem:[%s338 + $0x18] sm:$0xff]
  %v343 = vpack.c.bf16 %v336, %v336
  %344 = vmatpush.bf16.msra.mxu0 %v182
  %345 = vmatpush.bf16.msra.mxu0 %v178
  %346 = vmatpush.bf16.msra.mxu0 %v174
  %347 = vmatpush.bf16.msra.mxu0 %v170
  %348 = vmatpush.bf16.msra.mxu0 %v166
  %349 = vmatpush.bf16.msra.mxu0 %v162
  %350 = vmatpush.bf16.msra.mxu0 %v158
  %351 = vmatpush.bf16.msra.mxu0 %v154
  %352 = vmatmul.bf16.gmra.mxu0 %v343
  %v353 = vpop.f32.mrf.mxu0
  %v354 = vadd.f32 0.0, %v353
  %v355 = vpop.f32.mrf.mxu0
  %356 = vdwg.mxu0
  %357 = vmatpush.bf16.msra.mxu0 %v183
  %358 = vmatpush.bf16.msra.mxu0 %v179
  %359 = vmatpush.bf16.msra.mxu0 %v175
  %360 = vmatpush.bf16.msra.mxu0 %v171
  %361 = vmatpush.bf16.msra.mxu0 %v167
  %362 = vmatpush.bf16.msra.mxu0 %v163
  %363 = vmatpush.bf16.msra.mxu0 %v159
  %364 = vmatpush.bf16.msra.mxu0 %v155
  %365 = vmatmul.bf16.gmra.mxu0 %v343
  %v366 = vpop.f32.mrf.mxu0
  %v367 = vadd.f32 0.0, %v366
  %v368 = vpop.f32.mrf.mxu0
  %369 = vdwg.mxu0
  %370 = vmatpush.bf16.msra.mxu0 %v184
  %371 = vmatpush.bf16.msra.mxu0 %v180
  %372 = vmatpush.bf16.msra.mxu0 %v176
  %373 = vmatpush.bf16.msra.mxu0 %v172
  %374 = vmatpush.bf16.msra.mxu0 %v168
  %375 = vmatpush.bf16.msra.mxu0 %v164
  %376 = vmatpush.bf16.msra.mxu0 %v160
  %377 = vmatpush.bf16.msra.mxu0 %v156
  %378 = vmatmul.bf16.gmra.mxu0 %v343
  %v379 = vpop.f32.mrf.mxu0
  %v380 = vadd.f32 0.0, %v379
  %v381 = vpop.f32.mrf.mxu0
  %382 = vdwg.mxu0
  %383 = vmatpush.bf16.msra.mxu0 %v185
  %384 = vmatpush.bf16.msra.mxu0 %v181
  %385 = vmatpush.bf16.msra.mxu0 %v177
  %386 = vmatpush.bf16.msra.mxu0 %v173
  %387 = vmatpush.bf16.msra.mxu0 %v169
  %388 = vmatpush.bf16.msra.mxu0 %v165
  %389 = vmatpush.bf16.msra.mxu0 %v161
  %390 = vmatpush.bf16.msra.mxu0 %v157
  %391 = vmatmul.bf16.gmra.mxu0 %v343
  %v392 = vpop.f32.mrf.mxu0
  %v393 = vadd.f32 0.0, %v392
  %v394 = vpop.f32.mrf.mxu0
  %395 = vdwg.mxu0
  %v396 = vadd.f32 %v339, %v354
  %v397 = vadd.f32 %v340, %v367
  %v398 = vadd.f32 %v341, %v380
  %v399 = vadd.f32 %v342, %v393
  %v400 = vxor.u32 %v396, 2147483648
  %v401 = vmul.f32 %v400, 1.442695
  %v402 = vpow.pop %v401
  %v403 = vadd.f32 %v402, 1.0
  %v404 = vrcp.pop %v403
  %v405 = vmul.f32 %v403, %v404
  %v406 = vsub.f32 1.0, %v405
  %v407 = vmul.f32 %v404, %v406
  %v408 = vadd.f32 %v404, %v407
  %vm409 = vweird.f32 %v403
  %vm410 = vweird.f32 %v404
  %vm411 = vmor %vm409, %vm410
  %v412 = vsel %vm411, %v404, %v408
  %v413 = vand.u32 2147483647, %v403
  %vm414 = vcmp.eq.f32.partialorder %v413, 8.507059e+37
  %v415 = vand.u32 %v403, 2147483648
  %v416 = vor.u32 1.1754944e-38, %v415
  %v417 = vsel %vm414, %v416, %v412
  %v418 = vmul.f32 1.0, %v417
  %v419 = vxor.u32 %v397, 2147483648
  %v420 = vmul.f32 %v419, 1.442695
  %v421 = vpow.pop %v420
  %v422 = vadd.f32 %v421, 1.0
  %v423 = vrcp.pop %v422
  %v424 = vmul.f32 %v422, %v423
  %v425 = vsub.f32 1.0, %v424
  %v426 = vmul.f32 %v423, %v425
  %v427 = vadd.f32 %v423, %v426
  %vm428 = vweird.f32 %v422
  %vm429 = vweird.f32 %v423
  %vm430 = vmor %vm428, %vm429
  %v431 = vsel %vm430, %v423, %v427
  %v432 = vand.u32 2147483647, %v422
  %vm433 = vcmp.eq.f32.partialorder %v432, 8.507059e+37
  %v434 = vand.u32 %v422, 2147483648
  %v435 = vor.u32 1.1754944e-38, %v434
  %v436 = vsel %vm433, %v435, %v431
  %v437 = vmul.f32 1.0, %v436
  %v438 = vtanh.pop %v398
  %v439 = vxor.u32 %v399, 2147483648
  %v440 = vmul.f32 %v439, 1.442695
  %v441 = vpow.pop %v440
  %v442 = vadd.f32 %v441, 1.0
  %v443 = vrcp.pop %v442
  %v444 = vmul.f32 %v442, %v443
  %v445 = vsub.f32 1.0, %v444
  %v446 = vmul.f32 %v443, %v445
  %v447 = vadd.f32 %v443, %v446
  %vm448 = vweird.f32 %v442
  %vm449 = vweird.f32 %v443
  %vm450 = vmor %vm448, %vm449
  %v451 = vsel %vm450, %v443, %v447
  %v452 = vand.u32 2147483647, %v442
  %vm453 = vcmp.eq.f32.partialorder %v452, 8.507059e+37
  %v454 = vand.u32 %v442, 2147483648
  %v455 = vor.u32 1.1754944e-38, %v454
  %v456 = vsel %vm453, %v455, %v451
  %v457 = vmul.f32 1.0, %v456
  %v458 = vmul.f32 %v437, %v334
  %v459 = vmul.f32 %v418, %v438
  %v460 = vadd.f32 %v458, %v459
  %v461 = vtanh.pop %v460
  %v462 = vmul.f32 %v457, %v461
  %s463 = scalar_lea.vmem %s2, 8
  %464 = vst [vmem:[%s463] sm:$0xff] %v462
  %s465 = scalar_lea.vmem %s0, 64
  %v466 = vld [vmem:[%s465] sm:$0xff]
  %v467 = vld [vmem:[%s465 + $0x8] sm:$0xff]
  %v468 = vld [vmem:[%s465 + $0x10] sm:$0xff]
  %v469 = vld [vmem:[%s465 + $0x18] sm:$0xff]
  %v470 = vpack.c.bf16 %v462, %v462
  %471 = vmatpush.bf16.msra.mxu0 %v182
  %472 = vmatpush.bf16.msra.mxu0 %v178
  %473 = vmatpush.bf16.msra.mxu0 %v174
  %474 = vmatpush.bf16.msra.mxu0 %v170
  %475 = vmatpush.bf16.msra.mxu0 %v166
  %476 = vmatpush.bf16.msra.mxu0 %v162
  %477 = vmatpush.bf16.msra.mxu0 %v158
  %478 = vmatpush.bf16.msra.mxu0 %v154
  %479 = vmatmul.bf16.gmra.mxu0 %v470
  %v480 = vpop.f32.mrf.mxu0
  %v481 = vadd.f32 0.0, %v480
  %v482 = vpop.f32.mrf.mxu0
  %483 = vdwg.mxu0
  %484 = vmatpush.bf16.msra.mxu0 %v183
  %485 = vmatpush.bf16.msra.mxu0 %v179
  %486 = vmatpush.bf16.msra.mxu0 %v175
  %487 = vmatpush.bf16.msra.mxu0 %v171
  %488 = vmatpush.bf16.msra.mxu0 %v167
  %489 = vmatpush.bf16.msra.mxu0 %v163
  %490 = vmatpush.bf16.msra.mxu0 %v159
  %491 = vmatpush.bf16.msra.mxu0 %v155
  %492 = vmatmul.bf16.gmra.mxu0 %v470
  %v493 = vpop.f32.mrf.mxu0
  %v494 = vadd.f32 0.0, %v493
  %v495 = vpop.f32.mrf.mxu0
  %496 = vdwg.mxu0
  %497 = vmatpush.bf16.msra.mxu0 %v184
  %498 = vmatpush.bf16.msra.mxu0 %v180
  %499 = vmatpush.bf16.msra.mxu0 %v176
  %500 = vmatpush.bf16.msra.mxu0 %v172
  %501 = vmatpush.bf16.msra.mxu0 %v168
  %502 = vmatpush.bf16.msra.mxu0 %v164
  %503 = vmatpush.bf16.msra.mxu0 %v160
  %504 = vmatpush.bf16.msra.mxu0 %v156
  %505 = vmatmul.bf16.gmra.mxu0 %v470
  %v506 = vpop.f32.mrf.mxu0
  %v507 = vadd.f32 0.0, %v506
  %v508 = vpop.f32.mrf.mxu0
  %509 = vdwg.mxu0
  %510 = vmatpush.bf16.msra.mxu0 %v185
  %511 = vmatpush.bf16.msra.mxu0 %v181
  %512 = vmatpush.bf16.msra.mxu0 %v177
  %513 = vmatpush.bf16.msra.mxu0 %v173
  %514 = vmatpush.bf16.msra.mxu0 %v169
  %515 = vmatpush.bf16.msra.mxu0 %v165
  %516 = vmatpush.bf16.msra.mxu0 %v161
  %517 = vmatpush.bf16.msra.mxu0 %v157
  %518 = vmatmul.bf16.gmra.mxu0 %v470
  %v519 = vpop.f32.mrf.mxu0
  %v520 = vadd.f32 0.0, %v519
  %v521 = vpop.f32.mrf.mxu0
  %522 = vdwg.mxu0
  %v523 = vadd.f32 %v466, %v481
  %v524 = vadd.f32 %v467, %v494
  %v525 = vadd.f32 %v468, %v507
  %v526 = vadd.f32 %v469, %v520
  %v527 = vxor.u32 %v523, 2147483648
  %v528 = vmul.f32 %v527, 1.442695
  %v529 = vpow.pop %v528
  %v530 = vadd.f32 %v529, 1.0
  %v531 = vrcp.pop %v530
  %v532 = vmul.f32 %v530, %v531
  %v533 = vsub.f32 1.0, %v532
  %v534 = vmul.f32 %v531, %v533
  %v535 = vadd.f32 %v531, %v534
  %vm536 = vweird.f32 %v530
  %vm537 = vweird.f32 %v531
  %vm538 = vmor %vm536, %vm537
  %v539 = vsel %vm538, %v531, %v535
  %v540 = vand.u32 2147483647, %v530
  %vm541 = vcmp.eq.f32.partialorder %v540, 8.507059e+37
  %v542 = vand.u32 %v530, 2147483648
  %v543 = vor.u32 1.1754944e-38, %v542
  %v544 = vsel %vm541, %v543, %v539
  %v545 = vmul.f32 1.0, %v544
  %v546 = vxor.u32 %v524, 2147483648
  %v547 = vmul.f32 %v546, 1.442695
  %v548 = vpow.pop %v547
  %v549 = vadd.f32 %v548, 1.0
  %v550 = vrcp.pop %v549
  %v551 = vmul.f32 %v549, %v550
  %v552 = vsub.f32 1.0, %v551
  %v553 = vmul.f32 %v550, %v552
  %v554 = vadd.f32 %v550, %v553
  %vm555 = vweird.f32 %v549
  %vm556 = vweird.f32 %v550
  %vm557 = vmor %vm555, %vm556
  %v558 = vsel %vm557, %v550, %v554
  %v559 = vand.u32 2147483647, %v549
  %vm560 = vcmp.eq.f32.partialorder %v559, 8.507059e+37
  %v561 = vand.u32 %v549, 2147483648
  %v562 = vor.u32 1.1754944e-38, %v561
  %v563 = vsel %vm560, %v562, %v558
  %v564 = vmul.f32 1.0, %v563
  %v565 = vtanh.pop %v525
  %v566 = vxor.u32 %v526, 2147483648
  %v567 = vmul.f32 %v566, 1.442695
  %v568 = vpow.pop %v567
  %v569 = vadd.f32 %v568, 1.0
  %v570 = vrcp.pop %v569
  %v571 = vmul.f32 %v569, %v570
  %v572 = vsub.f32 1.0, %v571
  %v573 = vmul.f32 %v570, %v572
  %v574 = vadd.f32 %v570, %v573
  %vm575 = vweird.f32 %v569
  %vm576 = vweird.f32 %v570
  %vm577 = vmor %vm575, %vm576
  %v578 = vsel %vm577, %v570, %v574
  %v579 = vand.u32 2147483647, %v569
  %vm580 = vcmp.eq.f32.partialorder %v579, 8.507059e+37
  %v581 = vand.u32 %v569, 2147483648
  %v582 = vor.u32 1.1754944e-38, %v581
  %v583 = vsel %vm580, %v582, %v578
  %v584 = vmul.f32 1.0, %v583
  %v585 = vmul.f32 %v564, %v460
  %v586 = vmul.f32 %v545, %v565
  %v587 = vadd.f32 %v585, %v586
  %v588 = vtanh.pop %v587
  %v589 = vmul.f32 %v584, %v588
  %s590 = scalar_lea.vmem %s2, 16
  %591 = vst [vmem:[%s590] sm:$0xff] %v589
  %s592 = scalar_lea.vmem %s0, 96
  %v593 = vld [vmem:[%s592] sm:$0xff]
  %v594 = vld [vmem:[%s592 + $0x8] sm:$0xff]
  %v595 = vld [vmem:[%s592 + $0x10] sm:$0xff]
  %v596 = vld [vmem:[%s592 + $0x18] sm:$0xff]
  %v597 = vpack.c.bf16 %v589, %v589
  %598 = vmatpush.bf16.msra.mxu0 %v182
  %599 = vmatpush.bf16.msra.mxu0 %v178
  %600 = vmatpush.bf16.msra.mxu0 %v174
  %601 = vmatpush.bf16.msra.mxu0 %v170
  %602 = vmatpush.bf16.msra.mxu0 %v166
  %603 = vmatpush.bf16.msra.mxu0 %v162
  %604 = vmatpush.bf16.msra.mxu0 %v158
  %605 = vmatpush.bf16.msra.mxu0 %v154
  %606 = vmatmul.bf16.gmra.mxu0 %v597
  %v607 = vpop.f32.mrf.mxu0
  %v608 = vadd.f32 0.0, %v607
  %v609 = vpop.f32.mrf.mxu0
  %610 = vdwg.mxu0
  %611 = vmatpush.bf16.msra.mxu0 %v183
  %612 = vmatpush.bf16.msra.mxu0 %v179
  %613 = vmatpush.bf16.msra.mxu0 %v175
  %614 = vmatpush.bf16.msra.mxu0 %v171
  %615 = vmatpush.bf16.msra.mxu0 %v167
  %616 = vmatpush.bf16.msra.mxu0 %v163
  %617 = vmatpush.bf16.msra.mxu0 %v159
  %618 = vmatpush.bf16.msra.mxu0 %v155
  %619 = vmatmul.bf16.gmra.mxu0 %v597
  %v620 = vpop.f32.mrf.mxu0
  %v621 = vadd.f32 0.0, %v620
  %v622 = vpop.f32.mrf.mxu0
  %623 = vdwg.mxu0
  %624 = vmatpush.bf16.msra.mxu0 %v184
  %625 = vmatpush.bf16.msra.mxu0 %v180
  %626 = vmatpush.bf16.msra.mxu0 %v176
  %627 = vmatpush.bf16.msra.mxu0 %v172
  %628 = vmatpush.bf16.msra.mxu0 %v168
  %629 = vmatpush.bf16.msra.mxu0 %v164
  %630 = vmatpush.bf16.msra.mxu0 %v160
  %631 = vmatpush.bf16.msra.mxu0 %v156
  %632 = vmatmul.bf16.gmra.mxu0 %v597
  %v633 = vpop.f32.mrf.mxu0
  %v634 = vadd.f32 0.0, %v633
  %v635 = vpop.f32.mrf.mxu0
  %636 = vdwg.mxu0
  %637 = vmatpush.bf16.msra.mxu0 %v185
  %638 = vmatpush.bf16.msra.mxu0 %v181
  %639 = vmatpush.bf16.msra.mxu0 %v177
  %640 = vmatpush.bf16.msra.mxu0 %v173
  %641 = vmatpush.bf16.msra.mxu0 %v169
  %642 = vmatpush.bf16.msra.mxu0 %v165
  %643 = vmatpush.bf16.msra.mxu0 %v161
  %644 = vmatpush.bf16.msra.mxu0 %v157
  %645 = vmatmul.bf16.gmra.mxu0 %v597
  %v646 = vpop.f32.mrf.mxu0
  %v647 = vadd.f32 0.0, %v646
  %v648 = vpop.f32.mrf.mxu0
  %649 = vdwg.mxu0
  %v650 = vadd.f32 %v593, %v608
  %v651 = vadd.f32 %v594, %v621
  %v652 = vadd.f32 %v595, %v634
  %v653 = vadd.f32 %v596, %v647
  %v654 = vxor.u32 %v650, 2147483648
  %v655 = vmul.f32 %v654, 1.442695
  %v656 = vpow.pop %v655
  %v657 = vadd.f32 %v656, 1.0
  %v658 = vrcp.pop %v657
  %v659 = vmul.f32 %v657, %v658
  %v660 = vsub.f32 1.0, %v659
  %v661 = vmul.f32 %v658, %v660
  %v662 = vadd.f32 %v658, %v661
  %vm663 = vweird.f32 %v657
  %vm664 = vweird.f32 %v658
  %vm665 = vmor %vm663, %vm664
  %v666 = vsel %vm665, %v658, %v662
  %v667 = vand.u32 2147483647, %v657
  %vm668 = vcmp.eq.f32.partialorder %v667, 8.507059e+37
  %v669 = vand.u32 %v657, 2147483648
  %v670 = vor.u32 1.1754944e-38, %v669
  %v671 = vsel %vm668, %v670, %v666
  %v672 = vmul.f32 1.0, %v671
  %v673 = vxor.u32 %v651, 2147483648
  %v674 = vmul.f32 %v673, 1.442695
  %v675 = vpow.pop %v674
  %v676 = vadd.f32 %v675, 1.0
  %v677 = vrcp.pop %v676
  %v678 = vmul.f32 %v676, %v677
  %v679 = vsub.f32 1.0, %v678
  %v680 = vmul.f32 %v677, %v679
  %v681 = vadd.f32 %v677, %v680
  %vm682 = vweird.f32 %v676
  %vm683 = vweird.f32 %v677
  %vm684 = vmor %vm682, %vm683
  %v685 = vsel %vm684, %v677, %v681
  %v686 = vand.u32 2147483647, %v676
  %vm687 = vcmp.eq.f32.partialorder %v686, 8.507059e+37
  %v688 = vand.u32 %v676, 2147483648
  %v689 = vor.u32 1.1754944e-38, %v688
  %v690 = vsel %vm687, %v689, %v685
  %v691 = vmul.f32 1.0, %v690
  %v692 = vtanh.pop %v652
  %v693 = vxor.u32 %v653, 2147483648
  %v694 = vmul.f32 %v693, 1.442695
  %v695 = vpow.pop %v694
  %v696 = vadd.f32 %v695, 1.0
  %v697 = vrcp.pop %v696
  %v698 = vmul.f32 %v696, %v697
  %v699 = vsub.f32 1.0, %v698
  %v700 = vmul.f32 %v697, %v699
  %v701 = vadd.f32 %v697, %v700
  %vm702 = vweird.f32 %v696
  %vm703 = vweird.f32 %v697
  %vm704 = vmor %vm702, %vm703
  %v705 = vsel %vm704, %v697, %v701
  %v706 = vand.u32 2147483647, %v696
  %vm707 = vcmp.eq.f32.partialorder %v706, 8.507059e+37
  %v708 = vand.u32 %v696, 2147483648
  %v709 = vor.u32 1.1754944e-38, %v708
  %v710 = vsel %vm707, %v709, %v705
  %v711 = vmul.f32 1.0, %v710
  %v712 = vmul.f32 %v691, %v587
  %v713 = vmul.f32 %v672, %v692
  %v714 = vadd.f32 %v712, %v713
  %v715 = vtanh.pop %v714
  %v716 = vmul.f32 %v711, %v715
  %s717 = scalar_lea.vmem %s2, 24
  %718 = vst [vmem:[%s717] sm:$0xff] %v716
  %s719 = scalar_lea.vmem %s0, 128
  %v720 = vld [vmem:[%s719] sm:$0xff]
  %v721 = vld [vmem:[%s719 + $0x8] sm:$0xff]
  %v722 = vld [vmem:[%s719 + $0x10] sm:$0xff]
  %v723 = vld [vmem:[%s719 + $0x18] sm:$0xff]
  %v724 = vpack.c.bf16 %v716, %v716
  %725 = vmatpush.bf16.msra.mxu0 %v182
  %726 = vmatpush.bf16.msra.mxu0 %v178
  %727 = vmatpush.bf16.msra.mxu0 %v174
  %728 = vmatpush.bf16.msra.mxu0 %v170
  %729 = vmatpush.bf16.msra.mxu0 %v166
  %730 = vmatpush.bf16.msra.mxu0 %v162
  %731 = vmatpush.bf16.msra.mxu0 %v158
  %732 = vmatpush.bf16.msra.mxu0 %v154
  %733 = vmatmul.bf16.gmra.mxu0 %v724
  %v734 = vpop.f32.mrf.mxu0
  %v735 = vadd.f32 0.0, %v734
  %v736 = vpop.f32.mrf.mxu0
  %737 = vdwg.mxu0
  %738 = vmatpush.bf16.msra.mxu0 %v183
  %739 = vmatpush.bf16.msra.mxu0 %v179
  %740 = vmatpush.bf16.msra.mxu0 %v175
  %741 = vmatpush.bf16.msra.mxu0 %v171
  %742 = vmatpush.bf16.msra.mxu0 %v167
  %743 = vmatpush.bf16.msra.mxu0 %v163
  %744 = vmatpush.bf16.msra.mxu0 %v159
  %745 = vmatpush.bf16.msra.mxu0 %v155
  %746 = vmatmul.bf16.gmra.mxu0 %v724
  %v747 = vpop.f32.mrf.mxu0
  %v748 = vadd.f32 0.0, %v747
  %v749 = vpop.f32.mrf.mxu0
  %750 = vdwg.mxu0
  %751 = vmatpush.bf16.msra.mxu0 %v184
  %752 = vmatpush.bf16.msra.mxu0 %v180
  %753 = vmatpush.bf16.msra.mxu0 %v176
  %754 = vmatpush.bf16.msra.mxu0 %v172
  %755 = vmatpush.bf16.msra.mxu0 %v168
  %756 = vmatpush.bf16.msra.mxu0 %v164
  %757 = vmatpush.bf16.msra.mxu0 %v160
  %758 = vmatpush.bf16.msra.mxu0 %v156
  %759 = vmatmul.bf16.gmra.mxu0 %v724
  %v760 = vpop.f32.mrf.mxu0
  %v761 = vadd.f32 0.0, %v760
  %v762 = vpop.f32.mrf.mxu0
  %763 = vdwg.mxu0
  %764 = vmatpush.bf16.msra.mxu0 %v185
  %765 = vmatpush.bf16.msra.mxu0 %v181
  %766 = vmatpush.bf16.msra.mxu0 %v177
  %767 = vmatpush.bf16.msra.mxu0 %v173
  %768 = vmatpush.bf16.msra.mxu0 %v169
  %769 = vmatpush.bf16.msra.mxu0 %v165
  %770 = vmatpush.bf16.msra.mxu0 %v161
  %771 = vmatpush.bf16.msra.mxu0 %v157
  %772 = vmatmul.bf16.gmra.mxu0 %v724
  %v773 = vpop.f32.mrf.mxu0
  %v774 = vadd.f32 0.0, %v773
  %v775 = vpop.f32.mrf.mxu0
  %776 = vdwg.mxu0
  %v777 = vadd.f32 %v720, %v735
  %v778 = vadd.f32 %v721, %v748
  %v779 = vadd.f32 %v722, %v761
  %v780 = vadd.f32 %v723, %v774
  %v781 = vxor.u32 %v777, 2147483648
  %v782 = vmul.f32 %v781, 1.442695
  %v783 = vpow.pop %v782
  %v784 = vadd.f32 %v783, 1.0
  %v785 = vrcp.pop %v784
  %v786 = vmul.f32 %v784, %v785
  %v787 = vsub.f32 1.0, %v786
  %v788 = vmul.f32 %v785, %v787
  %v789 = vadd.f32 %v785, %v788
  %vm790 = vweird.f32 %v784
  %vm791 = vweird.f32 %v785
  %vm792 = vmor %vm790, %vm791
  %v793 = vsel %vm792, %v785, %v789
  %v794 = vand.u32 2147483647, %v784
  %vm795 = vcmp.eq.f32.partialorder %v794, 8.507059e+37
  %v796 = vand.u32 %v784, 2147483648
  %v797 = vor.u32 1.1754944e-38, %v796
  %v798 = vsel %vm795, %v797, %v793
  %v799 = vmul.f32 1.0, %v798
  %v800 = vxor.u32 %v778, 2147483648
  %v801 = vmul.f32 %v800, 1.442695
  %v802 = vpow.pop %v801
  %v803 = vadd.f32 %v802, 1.0
  %v804 = vrcp.pop %v803
  %v805 = vmul.f32 %v803, %v804
  %v806 = vsub.f32 1.0, %v805
  %v807 = vmul.f32 %v804, %v806
  %v808 = vadd.f32 %v804, %v807
  %vm809 = vweird.f32 %v803
  %vm810 = vweird.f32 %v804
  %vm811 = vmor %vm809, %vm810
  %v812 = vsel %vm811, %v804, %v808
  %v813 = vand.u32 2147483647, %v803
  %vm814 = vcmp.eq.f32.partialorder %v813, 8.507059e+37
  %v815 = vand.u32 %v803, 2147483648
  %v816 = vor.u32 1.1754944e-38, %v815
  %v817 = vsel %vm814, %v816, %v812
  %v818 = vmul.f32 1.0, %v817
  %v819 = vtanh.pop %v779
  %v820 = vxor.u32 %v780, 2147483648
  %v821 = vmul.f32 %v820, 1.442695
  %v822 = vpow.pop %v821
  %v823 = vadd.f32 %v822, 1.0
  %v824 = vrcp.pop %v823
  %v825 = vmul.f32 %v823, %v824
  %v826 = vsub.f32 1.0, %v825
  %v827 = vmul.f32 %v824, %v826
  %v828 = vadd.f32 %v824, %v827
  %vm829 = vweird.f32 %v823
  %vm830 = vweird.f32 %v824
  %vm831 = vmor %vm829, %vm830
  %v832 = vsel %vm831, %v824, %v828
  %v833 = vand.u32 2147483647, %v823
  %vm834 = vcmp.eq.f32.partialorder %v833, 8.507059e+37
  %v835 = vand.u32 %v823, 2147483648
  %v836 = vor.u32 1.1754944e-38, %v835
  %v837 = vsel %vm834, %v836, %v832
  %v838 = vmul.f32 1.0, %v837
  %v839 = vmul.f32 %v818, %v714
  %v840 = vmul.f32 %v799, %v819
  %v841 = vadd.f32 %v839, %v840
  %v842 = vtanh.pop %v841
  %v843 = vmul.f32 %v838, %v842
  %s844 = scalar_lea.vmem %s2, 32
  %845 = vst [vmem:[%s844] sm:$0xff] %v843
  %s846 = scalar_lea.vmem %s0, 160
  %v847 = vld [vmem:[%s846] sm:$0xff]
  %v848 = vld [vmem:[%s846 + $0x8] sm:$0xff]
  %v849 = vld [vmem:[%s846 + $0x10] sm:$0xff]
  %v850 = vld [vmem:[%s846 + $0x18] sm:$0xff]
  %v851 = vpack.c.bf16 %v843, %v843
  %852 = vmatpush.bf16.msra.mxu0 %v182
  %853 = vmatpush.bf16.msra.mxu0 %v178
  %854 = vmatpush.bf16.msra.mxu0 %v174
  %855 = vmatpush.bf16.msra.mxu0 %v170
  %856 = vmatpush.bf16.msra.mxu0 %v166
  %857 = vmatpush.bf16.msra.mxu0 %v162
  %858 = vmatpush.bf16.msra.mxu0 %v158
  %859 = vmatpush.bf16.msra.mxu0 %v154
  %860 = vmatmul.bf16.gmra.mxu0 %v851
  %v861 = vpop.f32.mrf.mxu0
  %v862 = vadd.f32 0.0, %v861
  %v863 = vpop.f32.mrf.mxu0
  %864 = vdwg.mxu0
  %865 = vmatpush.bf16.msra.mxu0 %v183
  %866 = vmatpush.bf16.msra.mxu0 %v179
  %867 = vmatpush.bf16.msra.mxu0 %v175
  %868 = vmatpush.bf16.msra.mxu0 %v171
  %869 = vmatpush.bf16.msra.mxu0 %v167
  %870 = vmatpush.bf16.msra.mxu0 %v163
  %871 = vmatpush.bf16.msra.mxu0 %v159
  %872 = vmatpush.bf16.msra.mxu0 %v155
  %873 = vmatmul.bf16.gmra.mxu0 %v851
  %v874 = vpop.f32.mrf.mxu0
  %v875 = vadd.f32 0.0, %v874
  %v876 = vpop.f32.mrf.mxu0
  %877 = vdwg.mxu0
  %878 = vmatpush.bf16.msra.mxu0 %v184
  %879 = vmatpush.bf16.msra.mxu0 %v180
  %880 = vmatpush.bf16.msra.mxu0 %v176
  %881 = vmatpush.bf16.msra.mxu0 %v172
  %882 = vmatpush.bf16.msra.mxu0 %v168
  %883 = vmatpush.bf16.msra.mxu0 %v164
  %884 = vmatpush.bf16.msra.mxu0 %v160
  %885 = vmatpush.bf16.msra.mxu0 %v156
  %886 = vmatmul.bf16.gmra.mxu0 %v851
  %v887 = vpop.f32.mrf.mxu0
  %v888 = vadd.f32 0.0, %v887
  %v889 = vpop.f32.mrf.mxu0
  %890 = vdwg.mxu0
  %891 = vmatpush.bf16.msra.mxu0 %v185
  %892 = vmatpush.bf16.msra.mxu0 %v181
  %893 = vmatpush.bf16.msra.mxu0 %v177
  %894 = vmatpush.bf16.msra.mxu0 %v173
  %895 = vmatpush.bf16.msra.mxu0 %v169
  %896 = vmatpush.bf16.msra.mxu0 %v165
  %897 = vmatpush.bf16.msra.mxu0 %v161
  %898 = vmatpush.bf16.msra.mxu0 %v157
  %899 = vmatmul.bf16.gmra.mxu0 %v851
  %v900 = vpop.f32.mrf.mxu0
  %v901 = vadd.f32 0.0, %v900
  %v902 = vpop.f32.mrf.mxu0
  %903 = vdwg.mxu0
  %v904 = vadd.f32 %v847, %v862
  %v905 = vadd.f32 %v848, %v875
  %v906 = vadd.f32 %v849, %v888
  %v907 = vadd.f32 %v850, %v901
  %v908 = vxor.u32 %v904, 2147483648
  %v909 = vmul.f32 %v908, 1.442695
  %v910 = vpow.pop %v909
  %v911 = vadd.f32 %v910, 1.0
  %v912 = vrcp.pop %v911
  %v913 = vmul.f32 %v911, %v912
  %v914 = vsub.f32 1.0, %v913
  %v915 = vmul.f32 %v912, %v914
  %v916 = vadd.f32 %v912, %v915
  %vm917 = vweird.f32 %v911
  %vm918 = vweird.f32 %v912
  %vm919 = vmor %vm917, %vm918
  %v920 = vsel %vm919, %v912, %v916
  %v921 = vand.u32 2147483647, %v911
  %vm922 = vcmp.eq.f32.partialorder %v921, 8.507059e+37
  %v923 = vand.u32 %v911, 2147483648
  %v924 = vor.u32 1.1754944e-38, %v923
  %v925 = vsel %vm922, %v924, %v920
  %v926 = vmul.f32 1.0, %v925
  %v927 = vxor.u32 %v905, 2147483648
  %v928 = vmul.f32 %v927, 1.442695
  %v929 = vpow.pop %v928
  %v930 = vadd.f32 %v929, 1.0
  %v931 = vrcp.pop %v930
  %v932 = vmul.f32 %v930, %v931
  %v933 = vsub.f32 1.0, %v932
  %v934 = vmul.f32 %v931, %v933
  %v935 = vadd.f32 %v931, %v934
  %vm936 = vweird.f32 %v930
  %vm937 = vweird.f32 %v931
  %vm938 = vmor %vm936, %vm937
  %v939 = vsel %vm938, %v931, %v935
  %v940 = vand.u32 2147483647, %v930
  %vm941 = vcmp.eq.f32.partialorder %v940, 8.507059e+37
  %v942 = vand.u32 %v930, 2147483648
  %v943 = vor.u32 1.1754944e-38, %v942
  %v944 = vsel %vm941, %v943, %v939
  %v945 = vmul.f32 1.0, %v944
  %v946 = vtanh.pop %v906
  %v947 = vxor.u32 %v907, 2147483648
  %v948 = vmul.f32 %v947, 1.442695
  %v949 = vpow.pop %v948
  %v950 = vadd.f32 %v949, 1.0
  %v951 = vrcp.pop %v950
  %v952 = vmul.f32 %v950, %v951
  %v953 = vsub.f32 1.0, %v952
  %v954 = vmul.f32 %v951, %v953
  %v955 = vadd.f32 %v951, %v954
  %vm956 = vweird.f32 %v950
  %vm957 = vweird.f32 %v951
  %vm958 = vmor %vm956, %vm957
  %v959 = vsel %vm958, %v951, %v955
  %v960 = vand.u32 2147483647, %v950
  %vm961 = vcmp.eq.f32.partialorder %v960, 8.507059e+37
  %v962 = vand.u32 %v950, 2147483648
  %v963 = vor.u32 1.1754944e-38, %v962
  %v964 = vsel %vm961, %v963, %v959
  %v965 = vmul.f32 1.0, %v964
  %v966 = vmul.f32 %v945, %v841
  %v967 = vmul.f32 %v926, %v946
  %v968 = vadd.f32 %v966, %v967
  %v969 = vtanh.pop %v968
  %v970 = vmul.f32 %v965, %v969
  %s971 = scalar_lea.vmem %s2, 40
  %972 = vst [vmem:[%s971] sm:$0xff] %v970
  %s973 = scalar_lea.vmem %s0, 192
  %v974 = vld [vmem:[%s973] sm:$0xff]
  %v975 = vld [vmem:[%s973 + $0x8] sm:$0xff]
  %v976 = vld [vmem:[%s973 + $0x10] sm:$0xff]
  %v977 = vld [vmem:[%s973 + $0x18] sm:$0xff]
  %v978 = vpack.c.bf16 %v970, %v970
  %979 = vmatpush.bf16.msra.mxu0 %v182
  %980 = vmatpush.bf16.msra.mxu0 %v178
  %981 = vmatpush.bf16.msra.mxu0 %v174
  %982 = vmatpush.bf16.msra.mxu0 %v170
  %983 = vmatpush.bf16.msra.mxu0 %v166
  %984 = vmatpush.bf16.msra.mxu0 %v162
  %985 = vmatpush.bf16.msra.mxu0 %v158
  %986 = vmatpush.bf16.msra.mxu0 %v154
  %987 = vmatmul.bf16.gmra.mxu0 %v978
  %v988 = vpop.f32.mrf.mxu0
  %v989 = vadd.f32 0.0, %v988
  %v990 = vpop.f32.mrf.mxu0
  %991 = vdwg.mxu0
  %992 = vmatpush.bf16.msra.mxu0 %v183
  %993 = vmatpush.bf16.msra.mxu0 %v179
  %994 = vmatpush.bf16.msra.mxu0 %v175
  %995 = vmatpush.bf16.msra.mxu0 %v171
  %996 = vmatpush.bf16.msra.mxu0 %v167
  %997 = vmatpush.bf16.msra.mxu0 %v163
  %998 = vmatpush.bf16.msra.mxu0 %v159
  %999 = vmatpush.bf16.msra.mxu0 %v155
  %1000 = vmatmul.bf16.gmra.mxu0 %v978
  %v1001 = vpop.f32.mrf.mxu0
  %v1002 = vadd.f32 0.0, %v1001
  %v1003 = vpop.f32.mrf.mxu0
  %1004 = vdwg.mxu0
  %1005 = vmatpush.bf16.msra.mxu0 %v184
  %1006 = vmatpush.bf16.msra.mxu0 %v180
  %1007 = vmatpush.bf16.msra.mxu0 %v176
  %1008 = vmatpush.bf16.msra.mxu0 %v172
  %1009 = vmatpush.bf16.msra.mxu0 %v168
  %1010 = vmatpush.bf16.msra.mxu0 %v164
  %1011 = vmatpush.bf16.msra.mxu0 %v160
  %1012 = vmatpush.bf16.msra.mxu0 %v156
  %1013 = vmatmul.bf16.gmra.mxu0 %v978
  %v1014 = vpop.f32.mrf.mxu0
  %v1015 = vadd.f32 0.0, %v1014
  %v1016 = vpop.f32.mrf.mxu0
  %1017 = vdwg.mxu0
  %1018 = vmatpush.bf16.msra.mxu0 %v185
  %1019 = vmatpush.bf16.msra.mxu0 %v181
  %1020 = vmatpush.bf16.msra.mxu0 %v177
  %1021 = vmatpush.bf16.msra.mxu0 %v173
  %1022 = vmatpush.bf16.msra.mxu0 %v169
  %1023 = vmatpush.bf16.msra.mxu0 %v165
  %1024 = vmatpush.bf16.msra.mxu0 %v161
  %1025 = vmatpush.bf16.msra.mxu0 %v157
  %1026 = vmatmul.bf16.gmra.mxu0 %v978
  %v1027 = vpop.f32.mrf.mxu0
  %v1028 = vadd.f32 0.0, %v1027
  %v1029 = vpop.f32.mrf.mxu0
  %1030 = vdwg.mxu0
  %v1031 = vadd.f32 %v974, %v989
  %v1032 = vadd.f32 %v975, %v1002
  %v1033 = vadd.f32 %v976, %v1015
  %v1034 = vadd.f32 %v977, %v1028
  %v1035 = vxor.u32 %v1031, 2147483648
  %v1036 = vmul.f32 %v1035, 1.442695
  %v1037 = vpow.pop %v1036
  %v1038 = vadd.f32 %v1037, 1.0
  %v1039 = vrcp.pop %v1038
  %v1040 = vmul.f32 %v1038, %v1039
  %v1041 = vsub.f32 1.0, %v1040
  %v1042 = vmul.f32 %v1039, %v1041
  %v1043 = vadd.f32 %v1039, %v1042
  %vm1044 = vweird.f32 %v1038
  %vm1045 = vweird.f32 %v1039
  %vm1046 = vmor %vm1044, %vm1045
  %v1047 = vsel %vm1046, %v1039, %v1043
  %v1048 = vand.u32 2147483647, %v1038
  %vm1049 = vcmp.eq.f32.partialorder %v1048, 8.507059e+37
  %v1050 = vand.u32 %v1038, 2147483648
  %v1051 = vor.u32 1.1754944e-38, %v1050
  %v1052 = vsel %vm1049, %v1051, %v1047
  %v1053 = vmul.f32 1.0, %v1052
  %v1054 = vxor.u32 %v1032, 2147483648
  %v1055 = vmul.f32 %v1054, 1.442695
  %v1056 = vpow.pop %v1055
  %v1057 = vadd.f32 %v1056, 1.0
  %v1058 = vrcp.pop %v1057
  %v1059 = vmul.f32 %v1057, %v1058
  %v1060 = vsub.f32 1.0, %v1059
  %v1061 = vmul.f32 %v1058, %v1060
  %v1062 = vadd.f32 %v1058, %v1061
  %vm1063 = vweird.f32 %v1057
  %vm1064 = vweird.f32 %v1058
  %vm1065 = vmor %vm1063, %vm1064
  %v1066 = vsel %vm1065, %v1058, %v1062
  %v1067 = vand.u32 2147483647, %v1057
  %vm1068 = vcmp.eq.f32.partialorder %v1067, 8.507059e+37
  %v1069 = vand.u32 %v1057, 2147483648
  %v1070 = vor.u32 1.1754944e-38, %v1069
  %v1071 = vsel %vm1068, %v1070, %v1066
  %v1072 = vmul.f32 1.0, %v1071
  %v1073 = vtanh.pop %v1033
  %v1074 = vxor.u32 %v1034, 2147483648
  %v1075 = vmul.f32 %v1074, 1.442695
  %v1076 = vpow.pop %v1075
  %v1077 = vadd.f32 %v1076, 1.0
  %v1078 = vrcp.pop %v1077
  %v1079 = vmul.f32 %v1077, %v1078
  %v1080 = vsub.f32 1.0, %v1079
  %v1081 = vmul.f32 %v1078, %v1080
  %v1082 = vadd.f32 %v1078, %v1081
  %vm1083 = vweird.f32 %v1077
  %vm1084 = vweird.f32 %v1078
  %vm1085 = vmor %vm1083, %vm1084
  %v1086 = vsel %vm1085, %v1078, %v1082
  %v1087 = vand.u32 2147483647, %v1077
  %vm1088 = vcmp.eq.f32.partialorder %v1087, 8.507059e+37
  %v1089 = vand.u32 %v1077, 2147483648
  %v1090 = vor.u32 1.1754944e-38, %v1089
  %v1091 = vsel %vm1088, %v1090, %v1086
  %v1092 = vmul.f32 1.0, %v1091
  %v1093 = vmul.f32 %v1072, %v968
  %v1094 = vmul.f32 %v1053, %v1073
  %v1095 = vadd.f32 %v1093, %v1094
  %v1096 = vtanh.pop %v1095
  %v1097 = vmul.f32 %v1092, %v1096
  %s1098 = scalar_lea.vmem %s2, 48
  %1099 = vst [vmem:[%s1098] sm:$0xff] %v1097
  %s1100 = scalar_lea.vmem %s0, 224
  %v1101 = vld [vmem:[%s1100] sm:$0xff]
  %v1102 = vld [vmem:[%s1100 + $0x8] sm:$0xff]
  %v1103 = vld [vmem:[%s1100 + $0x10] sm:$0xff]
  %v1104 = vld [vmem:[%s1100 + $0x18] sm:$0xff]
  %v1105 = vpack.c.bf16 %v1097, %v1097
  %1106 = vmatpush.bf16.msra.mxu0 %v182
  %1107 = vmatpush.bf16.msra.mxu0 %v178
  %1108 = vmatpush.bf16.msra.mxu0 %v174
  %1109 = vmatpush.bf16.msra.mxu0 %v170
  %1110 = vmatpush.bf16.msra.mxu0 %v166
  %1111 = vmatpush.bf16.msra.mxu0 %v162
  %1112 = vmatpush.bf16.msra.mxu0 %v158
  %1113 = vmatpush.bf16.msra.mxu0 %v154
  %1114 = vmatmul.bf16.gmra.mxu0 %v1105
  %v1115 = vpop.f32.mrf.mxu0
  %v1116 = vadd.f32 0.0, %v1115
  %v1117 = vpop.f32.mrf.mxu0
  %1118 = vdwg.mxu0
  %1119 = vmatpush.bf16.msra.mxu0 %v183
  %1120 = vmatpush.bf16.msra.mxu0 %v179
  %1121 = vmatpush.bf16.msra.mxu0 %v175
  %1122 = vmatpush.bf16.msra.mxu0 %v171
  %1123 = vmatpush.bf16.msra.mxu0 %v167
  %1124 = vmatpush.bf16.msra.mxu0 %v163
  %1125 = vmatpush.bf16.msra.mxu0 %v159
  %1126 = vmatpush.bf16.msra.mxu0 %v155
  %1127 = vmatmul.bf16.gmra.mxu0 %v1105
  %v1128 = vpop.f32.mrf.mxu0
  %v1129 = vadd.f32 0.0, %v1128
  %v1130 = vpop.f32.mrf.mxu0
  %1131 = vdwg.mxu0
  %1132 = vmatpush.bf16.msra.mxu0 %v184
  %1133 = vmatpush.bf16.msra.mxu0 %v180
  %1134 = vmatpush.bf16.msra.mxu0 %v176
  %1135 = vmatpush.bf16.msra.mxu0 %v172
  %1136 = vmatpush.bf16.msra.mxu0 %v168
  %1137 = vmatpush.bf16.msra.mxu0 %v164
  %1138 = vmatpush.bf16.msra.mxu0 %v160
  %1139 = vmatpush.bf16.msra.mxu0 %v156
  %1140 = vmatmul.bf16.gmra.mxu0 %v1105
  %v1141 = vpop.f32.mrf.mxu0
  %v1142 = vadd.f32 0.0, %v1141
  %v1143 = vpop.f32.mrf.mxu0
  %1144 = vdwg.mxu0
  %1145 = vmatpush.bf16.msra.mxu0 %v185
  %1146 = vmatpush.bf16.msra.mxu0 %v181
  %1147 = vmatpush.bf16.msra.mxu0 %v177
  %1148 = vmatpush.bf16.msra.mxu0 %v173
  %1149 = vmatpush.bf16.msra.mxu0 %v169
  %1150 = vmatpush.bf16.msra.mxu0 %v165
  %1151 = vmatpush.bf16.msra.mxu0 %v161
  %1152 = vmatpush.bf16.msra.mxu0 %v157
  %1153 = vmatmul.bf16.gmra.mxu0 %v1105
  %v1154 = vpop.f32.mrf.mxu0
  %v1155 = vadd.f32 0.0, %v1154
  %v1156 = vpop.f32.mrf.mxu0
  %1157 = vdwg.mxu0
  %v1158 = vadd.f32 %v1101, %v1116
  %v1159 = vadd.f32 %v1102, %v1129
  %v1160 = vadd.f32 %v1103, %v1142
  %v1161 = vadd.f32 %v1104, %v1155
  %v1162 = vxor.u32 %v1158, 2147483648
  %v1163 = vmul.f32 %v1162, 1.442695
  %v1164 = vpow.pop %v1163
  %v1165 = vadd.f32 %v1164, 1.0
  %v1166 = vrcp.pop %v1165
  %v1167 = vmul.f32 %v1165, %v1166
  %v1168 = vsub.f32 1.0, %v1167
  %v1169 = vmul.f32 %v1166, %v1168
  %v1170 = vadd.f32 %v1166, %v1169
  %vm1171 = vweird.f32 %v1165
  %vm1172 = vweird.f32 %v1166
  %vm1173 = vmor %vm1171, %vm1172
  %v1174 = vsel %vm1173, %v1166, %v1170
  %v1175 = vand.u32 2147483647, %v1165
  %vm1176 = vcmp.eq.f32.partialorder %v1175, 8.507059e+37
  %v1177 = vand.u32 %v1165, 2147483648
  %v1178 = vor.u32 1.1754944e-38, %v1177
  %v1179 = vsel %vm1176, %v1178, %v1174
  %v1180 = vmul.f32 1.0, %v1179
  %v1181 = vxor.u32 %v1159, 2147483648
  %v1182 = vmul.f32 %v1181, 1.442695
  %v1183 = vpow.pop %v1182
  %v1184 = vadd.f32 %v1183, 1.0
  %v1185 = vrcp.pop %v1184
  %v1186 = vmul.f32 %v1184, %v1185
  %v1187 = vsub.f32 1.0, %v1186
  %v1188 = vmul.f32 %v1185, %v1187
  %v1189 = vadd.f32 %v1185, %v1188
  %vm1190 = vweird.f32 %v1184
  %vm1191 = vweird.f32 %v1185
  %vm1192 = vmor %vm1190, %vm1191
  %v1193 = vsel %vm1192, %v1185, %v1189
  %v1194 = vand.u32 2147483647, %v1184
  %vm1195 = vcmp.eq.f32.partialorder %v1194, 8.507059e+37
  %v1196 = vand.u32 %v1184, 2147483648
  %v1197 = vor.u32 1.1754944e-38, %v1196
  %v1198 = vsel %vm1195, %v1197, %v1193
  %v1199 = vmul.f32 1.0, %v1198
  %v1200 = vtanh.pop %v1160
  %v1201 = vxor.u32 %v1161, 2147483648
  %v1202 = vmul.f32 %v1201, 1.442695
  %v1203 = vpow.pop %v1202
  %v1204 = vadd.f32 %v1203, 1.0
  %v1205 = vrcp.pop %v1204
  %v1206 = vmul.f32 %v1204, %v1205
  %v1207 = vsub.f32 1.0, %v1206
  %v1208 = vmul.f32 %v1205, %v1207
  %v1209 = vadd.f32 %v1205, %v1208
  %vm1210 = vweird.f32 %v1204
  %vm1211 = vweird.f32 %v1205
  %vm1212 = vmor %vm1210, %vm1211
  %v1213 = vsel %vm1212, %v1205, %v1209
  %v1214 = vand.u32 2147483647, %v1204
  %vm1215 = vcmp.eq.f32.partialorder %v1214, 8.507059e+37
  %v1216 = vand.u32 %v1204, 2147483648
  %v1217 = vor.u32 1.1754944e-38, %v1216
  %v1218 = vsel %vm1215, %v1217, %v1213
  %v1219 = vmul.f32 1.0, %v1218
  %v1220 = vmul.f32 %v1199, %v1095
  %v1221 = vmul.f32 %v1180, %v1200
  %v1222 = vadd.f32 %v1220, %v1221
  %v1223 = vtanh.pop %v1222
  %v1224 = vmul.f32 %v1219, %v1223
  %s1225 = scalar_lea.vmem %s2, 56
  %1226 = vst [vmem:[%s1225] sm:$0xff] %v1224
  %1227 = vst [vmem:[#allocation2] sm:$0xff] %v1224
  %1228 = vst [vmem:[#allocation3] sm:$0xff] %v1222
  // Predicated region
  $region14: #{encoder_forward.2} parent=0 // pred_check
    %p1229 = pneg %p13
  $region15: #{encoder_forward.2} parent=0 // pred_check_branch
    %1231 = sbr.rel (%p1229) target = $region17
  $region16: #{encoder_forward.2} parent=0 // pred_region
    %1232 = vst [vmem:[%s3] sm:$0xff] %v1222
  $region17: #{encoder_forward.2} parent=0 // pred_fallthru
    _
  // Predicated region
  $region18: #{encoder_forward.2} parent=0 // pred_check
    _
  $region19: #{encoder_forward.2} parent=0 // pred_check_branch
    %1234 = sbr.rel (0) target = $region21
  $region20: #{encoder_forward.2} parent=0 // pred_region
    _
  $region21: #{encoder_forward.2} parent=0 // pred_fallthru
    _
  // Predicated region
  $region22: #{encoder_forward.2} parent=0 // pred_check
    _
  $region23: #{encoder_forward.2} parent=0 // pred_check_branch
    %1236 = sbr.rel (0) target = $region25
  $region24: #{encoder_forward.2} parent=0 // pred_region
    _
  $region25: #{encoder_forward.2} parent=0 // pred_fallthru
    _
  // Predicated region
  $region26: #{encoder_forward.2} parent=0 // pred_check
    _
  $region27: #{encoder_forward.2} parent=0 // pred_check_branch
    %1238 = sbr.rel (0) target = $region29
  $region28: #{encoder_forward.2} parent=0 // pred_region
    _
  $region29: #{encoder_forward.2} parent=0 // pred_fallthru
    _
  // Predicated region
  $region30: #{encoder_forward.2} parent=0 // pred_check
    _
  $region31: #{encoder_forward.2} parent=0 // pred_check_branch
    %1240 = sbr.rel (0) target = $region33
  $region32: #{encoder_forward.2} parent=0 // pred_region
    _
  $region33: #{encoder_forward.2} parent=0 // pred_fallthru
    _

</llo_original>
